<compile_context>
chip_gen: v6e
topology: v6e:2x2x1
jax: 0.10.0
libtpu: 0.0.40
codegen_flags: <defaults>
</compile_context>

<pallas_src>
import jax
import jax.numpy as jnp
import numpy as np
from jax.experimental import pallas as pl
from jax.experimental.pallas import tpu as pltpu


def _round_up(x, m):
    return (x + m - 1) // m * m


def _cdiv(a, b):
    return -(-a // b)


def _vmem_capacity_bytes():
    try:
        return int(pltpu.get_tpu_info().vmem_capacity_bytes)
    except Exception:
        return 64 * 1024 * 1024  # conservative (v7x per-TensorCore)


# ----------------------------------------------------------------------------
# Fused kernel: merged conv (all filter sizes in one weight) + length-chunked
# running max-pool + bias + ReLU + final Linear, one batch tile per grid step.
# ----------------------------------------------------------------------------
def _make_fused_kernel(filter_sizes, F_pad, L_orig, Ek, CH, n_chunks, max_fs,
                       use_im2col):
    n = len(filter_sizes)
    nF = n * F_pad

    def kernel(x_ref, cw_ref, cb_ref, lw_ref, lb_ref, o_ref):
        # x_ref : (TB, L_pad, Ek) bf16
        # cw_ref: (max_fs*Ek, nF) bf16   merged conv weight, taps zero-padded
        # cb_ref: (1, nF) f32            merged conv bias
        # lw_ref: (nF, C_pad) bf16
        # lb_ref: (1, C_pad) f32
        # o_ref : (TB, C_pad) f32
        TB = x_ref.shape[0]

        pooled = None  # running (TB, nF) f32 max over length chunks
        for c in range(n_chunks):
            s = c * CH  # Python constant: static slicing below

            if use_im2col:
                # Small E: im2col slab so K = max_fs*E fills the MXU depth.
                slab = jnp.concatenate(
                    [x_ref[:, s + t:s + t + CH, :] for t in range(max_fs)],
                    axis=-1)
                acc = jnp.dot(slab.reshape(TB * CH, max_fs * Ek), cw_ref[...],
                              preferred_element_type=jnp.float32)
            else:
                # Large E: accumulate shifted-view dots (no fs-times x copies).
                acc = None
                for t in range(max_fs):
                    xt = x_ref[:, s + t:s + t + CH, :].reshape(TB * CH, Ek)
                    part = jnp.dot(xt, cw_ref[t * Ek:(t + 1) * Ek, :],
                                   preferred_element_type=jnp.float32)
                    acc = part if acc is None else acc + part
            acc = acc.reshape(TB, CH, nF)

            # Per-filter-size pooling over STATIC valid slices (no mask iota).
            parts = []
            for i, fs in enumerate(filter_sizes):
                valid = L_orig - fs + 1
                n_valid = min(max(valid - s, 0), CH)  # Python constant
                if n_valid > 0:
                    parts.append(
                        jnp.max(acc[:, :n_valid, i * F_pad:(i + 1) * F_pad],
                                axis=1))
                else:
                    parts.append(jnp.full((TB, F_pad), -jnp.inf, jnp.float32))
            chunk_pooled = jnp.concatenate(parts, axis=-1)  # (TB, nF) f32
            pooled = (chunk_pooled if pooled is None
                      else jnp.maximum(pooled, chunk_pooled))

        # bias after pool + ReLU, then the final Linear -- all in VMEM.
        h = jnp.maximum(pooled + cb_ref[...], 0.0).astype(jnp.bfloat16)
        o_ref[...] = (jnp.dot(h, lw_ref[...],
                              preferred_element_type=jnp.float32)
                      + lb_ref[...]).astype(o_ref.dtype)

    return kernel


# ----------------------------------------------------------------------------
# Full KimCNN forward.
# ----------------------------------------------------------------------------
def kim_cnn_forward(text, params):
    embed_vecs = params["embed_vecs"]            # (vocab, E) f32
    convs = params["convs"]                      # list of (w (fs,E,F), b (F,))
    linear_w = params["linear_w"]                # (n*F, num_classes) f32
    linear_b = params["linear_b"]                # (num_classes,) f32

    B, L = text.shape
    E = embed_vecs.shape[1]
    filter_sizes = tuple(int(w.shape[0]) for (w, _) in convs)
    n = len(filter_sizes)
    max_fs, min_fs = max(filter_sizes), min(filter_sizes)
    F = int(convs[0][1].shape[0])
    num_classes = linear_w.shape[1]
    assert L >= max_fs, "sequence shorter than largest filter (Conv1d would error)"

    # ---- layout constants -------------------------------------------------
    F_pad = _round_up(F, 128)                    # per-group lane padding
    nF = n * F_pad
    C_pad = _round_up(num_classes, 128)          # lane-dense output stores
    Ek = _round_up(E, 8)                         # sublane-aligned weight slices

    L_out_max = L - min_fs + 1
    CH = min(_round_up(L_out_max, 8), 256)       # length chunk (conv positions)
    n_chunks = _cdiv(L_out_max, CH)
    L_pad = n_chunks * CH + max_fs - 1           # keeps every tap slice in-bounds

    use_im2col = E < 128                         # K=fs*E only needed when E small

    # ---- embedding lookup, done once in bf16 -------------------------------
    emb_bf = embed_vecs.astype(jnp.bfloat16)
    x = jnp.take(emb_bf, text, axis=0)           # (B, L, E) bf16
    # TODO(synk): fuse this gather into the kernel via scalar-prefetched ids.

    # ---- merged conv weight (max_fs*Ek, nF): tap-major rows, group columns --
    tap_blocks = []
    for t in range(max_fs):
        row = []
        for (w, _) in convs:
            fs = w.shape[0]
            blk = w[t] if t < fs else jnp.zeros((E, F), w.dtype)
            blk = jnp.pad(blk, ((0, Ek - E), (0, F_pad - F)))
            row.append(blk)
        tap_blocks.append(jnp.concatenate(row, axis=1))     # (Ek, nF)
    cw = jnp.concatenate(tap_blocks, axis=0).astype(jnp.bfloat16)

    cb = jnp.concatenate(
        [jnp.pad(b, (0, F_pad - F)) for (_, b) in convs]
    ).reshape(1, nF).astype(jnp.float32)

    # ---- linear weight/bias (rows re-padded per group, class dim padded) ----
    lw_parts = [jnp.pad(linear_w[i * F:(i + 1) * F, :], ((0, F_pad - F), (0, 0)))
                for i in range(n)]
    lw = jnp.pad(jnp.concatenate(lw_parts, axis=0),
                 ((0, 0), (0, C_pad - num_classes))).astype(jnp.bfloat16)
    lb = jnp.pad(linear_b, (0, C_pad - num_classes)).reshape(1, C_pad)
    lb = lb.astype(jnp.float32)

    # ---- VMEM-budgeted batch tile ------------------------------------------
    capacity = _vmem_capacity_bytes()
    budget = int(capacity * 0.6)

    E_lane = _round_up(Ek, 128)
    Lp_sub = _round_up(L_pad, 16)
    CH_sub = _round_up(CH, 16)
    nF_lane = _round_up(nF, 128)
    K_lane = _round_up(max_fs * Ek, 128)
    weight_bytes = (_round_up(max_fs * Ek, 16) * nF_lane * 2    # cw bf16
                    + 8 * nF_lane * 4                           # cb f32
                    + _round_up(nF, 16) * C_pad * 2             # lw bf16
                    + 8 * C_pad * 4)                            # lb f32

    def footprint(tb):
        x_block = tb * Lp_sub * E_lane * 2                      # bf16
        slab = (tb * CH_sub * K_lane * 2) if use_im2col else (tb * CH_sub * E_lane * 2)
        acc = tb * CH_sub * nF_lane * 4                         # f32 activations
        pooled = 2 * tb * nF_lane * 4
        out_block = _round_up(tb, 8) * C_pad * 4
        return 2 * x_block + slab + acc + pooled + 2 * out_block + weight_bytes

    TB = 8
    while TB + 8 <= 512 and footprint(TB + 8) <= budget:
        TB += 8

    B_ceil8 = _round_up(B, 8)
    TB = min(TB, B_ceil8)
    # >=4 grid steps when the batch allows (pipeline overlap + v7x two-TC split)
    target_steps = 4 if B_ceil8 >= 32 else (2 if B_ceil8 >= 16 else 1)
    if _cdiv(B_ceil8, TB) < target_steps:
        TB = max(8, _round_up(_cdiv(B_ceil8, target_steps), 8))
    B_pad = _round_up(B_ceil8, TB)
    grid_len = B_pad // TB

    fp = footprint(TB)
    vmem_limit = int(max(fp * 1.25, 32 * 1024 * 1024))
    vmem_limit = max(min(vmem_limit, int(capacity * 0.9)), fp)

    # ---- pad activations (batch, length, embed) in bf16 ---------------------
    x = jnp.pad(x, ((0, B_pad - B), (0, L_pad - L), (0, Ek - E)))

    kernel = _make_fused_kernel(filter_sizes, F_pad, L, Ek, CH, n_chunks,
                                max_fs, use_im2col)

    def _const_spec(shape, buffered):
        idx = lambda i: tuple(0 for _ in shape)
        if buffered:
            return pl.BlockSpec(shape, idx, pipeline_mode=pl.Buffered(1))
        return pl.BlockSpec(shape, idx)

    def _run(buffered):
        in_specs = [
            pl.BlockSpec((TB, L_pad, Ek), lambda i: (i, 0, 0)),
            _const_spec((max_fs * Ek, nF), buffered),
            _const_spec((1, nF), buffered),
            _const_spec((nF, C_pad), buffered),
            _const_spec((1, C_pad), buffered),
        ]
        return pl.pallas_call(
            kernel,
            out_shape=jax.ShapeDtypeStruct((B_pad, C_pad), jnp.float32),
            grid=(grid_len,),
            in_specs=in_specs,
            out_specs=pl.BlockSpec((TB, C_pad), lambda i: (i, 0)),
            compiler_params=pltpu.CompilerParams(
                dimension_semantics=("parallel",),
                vmem_limit_bytes=vmem_limit,
            ),
        )(x, cw, cb, lw, lb)

    try:
        logits_padded = jax.block_until_ready(_run(True))
    except Exception:
        # pipeline_mode / Buffered(1) unavailable on this jax: plain specs.
        logits_padded = jax.block_until_ready(_run(False))

    return {"logits": logits_padded[:B, :num_classes]}


# ----------------------------------------------------------------------------
# Pure-JAX reference (mimics the bf16 MXU-input casts, f32 accumulation).
# ----------------------------------------------------------------------------
def kim_cnn_reference(text, params):
    emb = params["embed_vecs"].astype(jnp.bfloat16).astype(jnp.float32)
    x = jnp.take(emb, text, axis=0)                              # (B, L, E)
    pooled = []
    for (w, b) in params["convs"]:
        fs, _, F = w.shape
        wb = w.astype(jnp.bfloat16).astype(jnp.float32)
        L = x.shape[1]
        L_out = L - fs + 1
        acc = jnp.zeros((x.shape[0], L_out, F), jnp.float32)
        for t in range(fs):
            acc = acc + jnp.einsum("ble,ef->blf", x[:, t:t + L_out, :], wb[t])
        pooled.append(jnp.maximum(jnp.max(acc, axis=1) + b[None, :], 0.0))
    h = jnp.concatenate(pooled, axis=1).astype(jnp.bfloat16).astype(jnp.float32)
    lw = params["linear_w"].astype(jnp.bfloat16).astype(jnp.float32)
    return h @ lw + params["linear_b"]


if __name__ == "__main__":
    # Small, module-consistent shapes.
    vocab_size = 50
    embed_dim = 32              # E
    batch = 2                   # B
    seq_len = 16                # L
    filter_sizes = [2, 4]
    num_filter_per_size = 128   # F
    num_classes = 8

    key = jax.random.PRNGKey(0)
    k_emb, k_text, k_lw, k_lb, *k_convs = jax.random.split(
        key, 4 + 2 * len(filter_sizes))

    embed_vecs = jax.random.normal(k_emb, (vocab_size, embed_dim), jnp.float32) * 0.1
    text = jax.random.randint(k_text, (batch, seq_len), 0, vocab_size, jnp.int32)

    convs = []
    for i, fs in enumerate(filter_sizes):
        kw, kb = k_convs[2 * i], k_convs[2 * i + 1]
        # stored as (fs, E, F) == PyTorch Conv1d weight (F, E, fs) transposed
        w = jax.random.normal(kw, (fs, embed_dim, num_filter_per_size), jnp.float32) * 0.05
        b = jax.random.normal(kb, (num_filter_per_size,), jnp.float32) * 0.05
        convs.append((w, b))

    conv_output_size = num_filter_per_size * len(filter_sizes)
    linear_w = jax.random.normal(k_lw, (conv_output_size, num_classes), jnp.float32) * 0.05
    linear_b = jax.random.normal(k_lb, (num_classes,), jnp.float32) * 0.05

    params = {
        "embed_vecs": embed_vecs,
        "convs": convs,
        "linear_w": linear_w,
        "linear_b": linear_b,
    }

    out = kim_cnn_forward(text, params)
    logits = jax.block_until_ready(out["logits"])
    assert logits.shape == (batch, num_classes)

    ref = jax.block_until_ready(kim_cnn_reference(text, params))
    np.testing.assert_allclose(np.asarray(logits), np.asarray(ref),
                               rtol=1e-2, atol=1e-2)

    print("KERNEL_OK")
</pallas_src>

<mosaic_0001>
module attributes {stable_mosaic.version = 11 : i64} {
  func.func @kernel(%arg0: i32, %arg1: memref<8x19x32xbf16, #tpu.memory_space<vmem>>, %arg2: memref<128x256xbf16, #tpu.memory_space<vmem>>, %arg3: memref<1x256xf32, #tpu.memory_space<vmem>>, %arg4: memref<256x128xbf16, #tpu.memory_space<vmem>>, %arg5: memref<1x128xf32, #tpu.memory_space<vmem>>, %arg6: memref<8x128xf32, #tpu.memory_space<vmem>>) attributes {dimension_semantics = [#tpu.dimension_semantics<parallel>], iteration_bounds = array<i64: 1>, scalar_prefetch = 0 : i64, scratch_operands = 0 : i64, tpu.core_type = #tpu.core_type<tc>, window_params = [{transform_indices = @transform_0, window_bounds = array<i64: 8, 19, 32>}, {pipeline_mode = #tpu.pipeline_mode<synchronous>, transform_indices = @transform_1, window_bounds = array<i64: 128, 256>}, {pipeline_mode = #tpu.pipeline_mode<synchronous>, transform_indices = @transform_2, window_bounds = array<i64: 1, 256>}, {pipeline_mode = #tpu.pipeline_mode<synchronous>, transform_indices = @transform_3, window_bounds = array<i64: 256, 128>}, {pipeline_mode = #tpu.pipeline_mode<synchronous>, transform_indices = @transform_4, window_bounds = array<i64: 1, 128>}, {transform_indices = @transform_5, window_bounds = array<i64: 8, 128>}]} {
    %c0 = arith.constant 0 : index
    %c0_0 = arith.constant 0 : index
    %c0_1 = arith.constant 0 : index
    %0 = vector.load %arg1[%c0, %c0_0, %c0_1] : memref<8x19x32xbf16, #tpu.memory_space<vmem>>, vector<8x16x32xbf16>
    %c0_2 = arith.constant 0 : index
    %c1 = arith.constant 1 : index
    %c0_3 = arith.constant 0 : index
    %1 = vector.load %arg1[%c0_2, %c1, %c0_3] : memref<8x19x32xbf16, #tpu.memory_space<vmem>>, vector<8x16x32xbf16>
    %c0_4 = arith.constant 0 : index
    %c2 = arith.constant 2 : index
    %c0_5 = arith.constant 0 : index
    %2 = vector.load %arg1[%c0_4, %c2, %c0_5] : memref<8x19x32xbf16, #tpu.memory_space<vmem>>, vector<8x16x32xbf16>
    %c0_6 = arith.constant 0 : index
    %c3 = arith.constant 3 : index
    %c0_7 = arith.constant 0 : index
    %3 = vector.load %arg1[%c0_6, %c3, %c0_7] : memref<8x19x32xbf16, #tpu.memory_space<vmem>>, vector<8x16x32xbf16>
    %4 = tpu.concatenate %0, %1, %2, %3 in 2 : vector<8x16x32xbf16>, vector<8x16x32xbf16>, vector<8x16x32xbf16>, vector<8x16x32xbf16> -> vector<8x16x128xbf16>
    %5 = vector.shape_cast %4 : vector<8x16x128xbf16> to vector<128x128xbf16>
    %c0_8 = arith.constant 0 : index
    %c0_9 = arith.constant 0 : index
    %6 = vector.load %arg2[%c0_8, %c0_9] : memref<128x256xbf16, #tpu.memory_space<vmem>>, vector<128x256xbf16>
    %cst = arith.constant dense<0.000000e+00> : vector<128x256xf32>
    %7 = tpu.matmul %5, %6, %cst {dimension_numbers = #tpu.dot_dimension_numbers<[1], [0], [0], [1], [0, 0, 1, 1], [], []>} : vector<128x128xbf16>, vector<128x256xbf16>, vector<128x256xf32> -> vector<128x256xf32>
    %8 = vector.shape_cast %7 : vector<128x256xf32> to vector<8x16x256xf32>
    %9 = vector.extract_strided_slice %8 {offsets = [0, 0, 0], sizes = [8, 15, 128], strides = [1, 1, 1]} : vector<8x16x256xf32> to vector<8x15x128xf32>
    %cst_10 = arith.constant dense<0xFF800000> : vector<8x128xf32>
    %10 = vector.multi_reduction <maximumf>, %9, %cst_10 [1] : vector<8x15x128xf32> to vector<8x128xf32>
    %11 = vector.extract_strided_slice %8 {offsets = [0, 0, 128], sizes = [8, 13, 128], strides = [1, 1, 1]} : vector<8x16x256xf32> to vector<8x13x128xf32>
    %cst_11 = arith.constant dense<0xFF800000> : vector<8x128xf32>
    %12 = vector.multi_reduction <maximumf>, %11, %cst_11 [1] : vector<8x13x128xf32> to vector<8x128xf32>
    %13 = tpu.concatenate %10, %12 in 1 : vector<8x128xf32>, vector<8x128xf32> -> vector<8x256xf32>
    %c0_12 = arith.constant 0 : index
    %c0_13 = arith.constant 0 : index
    %14 = vector.load %arg3[%c0_12, %c0_13] : memref<1x256xf32, #tpu.memory_space<vmem>>, vector<1x256xf32>
    %15 = vector.broadcast %14 : vector<1x256xf32> to vector<8x256xf32>
    %16 = arith.addf %13, %15 : vector<8x256xf32>
    %cst_14 = arith.constant 0.000000e+00 : f32
    %17 = vector.broadcast %cst_14 : f32 to vector<8x256xf32>
    %18 = arith.maximumf %16, %17 : vector<8x256xf32>
    %19 = arith.truncf %18 : vector<8x256xf32> to vector<8x256xbf16>
    %c0_15 = arith.constant 0 : index
    %c0_16 = arith.constant 0 : index
    %20 = vector.load %arg4[%c0_15, %c0_16] : memref<256x128xbf16, #tpu.memory_space<vmem>>, vector<256x128xbf16>
    %cst_17 = arith.constant dense<0.000000e+00> : vector<8x128xf32>
    %21 = tpu.matmul %19, %20, %cst_17 {dimension_numbers = #tpu.dot_dimension_numbers<[1], [0], [0], [1], [0, 0, 1, 1], [], []>} : vector<8x256xbf16>, vector<256x128xbf16>, vector<8x128xf32> -> vector<8x128xf32>
    %c0_18 = arith.constant 0 : index
    %c0_19 = arith.constant 0 : index
    %22 = vector.load %arg5[%c0_18, %c0_19] : memref<1x128xf32, #tpu.memory_space<vmem>>, vector<1x128xf32>
    %23 = vector.broadcast %22 : vector<1x128xf32> to vector<8x128xf32>
    %24 = arith.addf %21, %23 : vector<8x128xf32>
    %c0_20 = arith.constant 0 : index
    %c0_21 = arith.constant 0 : index
    %25 = vector.load %arg6[%c0_20, %c0_21] : memref<8x128xf32, #tpu.memory_space<vmem>>, vector<8x128xf32>
    tpu.vector_store %arg6[%c0_20, %c0_21], %24 {strides = array<i32>} : memref<8x128xf32, #tpu.memory_space<vmem>>, vector<8x128xf32>,
    return
  }
  func.func @transform_0(%arg0: i32) -> (i32, i32, i32) {
    %c0_i32 = arith.constant 0 : i32
    %c0_i32_0 = arith.constant 0 : i32
    %c0_i32_1 = arith.constant 0 : i32
    return %arg0, %c0_i32, %c0_i32_0 : i32, i32, i32
  }
  func.func @transform_1(%arg0: i32) -> (i32, i32) {
    %c0_i32 = arith.constant 0 : i32
    %c0_i32_0 = arith.constant 0 : i32
    %c0_i32_1 = arith.constant 0 : i32
    return %c0_i32, %c0_i32_0 : i32, i32
  }
  func.func @transform_2(%arg0: i32) -> (i32, i32) {
    %c0_i32 = arith.constant 0 : i32
    %c0_i32_0 = arith.constant 0 : i32
    %c0_i32_1 = arith.constant 0 : i32
    return %c0_i32, %c0_i32_0 : i32, i32
  }
  func.func @transform_3(%arg0: i32) -> (i32, i32) {
    %c0_i32 = arith.constant 0 : i32
    %c0_i32_0 = arith.constant 0 : i32
    %c0_i32_1 = arith.constant 0 : i32
    return %c0_i32, %c0_i32_0 : i32, i32
  }
  func.func @transform_4(%arg0: i32) -> (i32, i32) {
    %c0_i32 = arith.constant 0 : i32
    %c0_i32_0 = arith.constant 0 : i32
    %c0_i32_1 = arith.constant 0 : i32
    return %c0_i32, %c0_i32_0 : i32, i32
  }
  func.func @transform_5(%arg0: i32) -> (i32, i32) {
    %c0_i32 = arith.constant 0 : i32
    %c0_i32_0 = arith.constant 0 : i32
    return %arg0, %c0_i32 : i32, i32
  }
}

module attributes {stable_mosaic.version = 11 : i64} {
  func.func @kernel(%arg0: i32, %arg1: memref<8x19x32xbf16, #tpu.memory_space<vmem>>, %arg2: memref<128x256xbf16, #tpu.memory_space<vmem>>, %arg3: memref<1x256xf32, #tpu.memory_space<vmem>>, %arg4: memref<256x128xbf16, #tpu.memory_space<vmem>>, %arg5: memref<1x128xf32, #tpu.memory_space<vmem>>, %arg6: memref<8x128xf32, #tpu.memory_space<vmem>>) attributes {dimension_semantics = [#tpu.dimension_semantics<parallel>], iteration_bounds = array<i64: 1>, scalar_prefetch = 0 : i64, scratch_operands = 0 : i64, tpu.core_type = #tpu.core_type<tc>, window_params = [{transform_indices = @transform_0, window_bounds = array<i64: 8, 19, 32>}, {pipeline_mode = #tpu.pipeline_mode<synchronous>, transform_indices = @transform_1, window_bounds = array<i64: 128, 256>}, {pipeline_mode = #tpu.pipeline_mode<synchronous>, transform_indices = @transform_2, window_bounds = array<i64: 1, 256>}, {pipeline_mode = #tpu.pipeline_mode<synchronous>, transform_indices = @transform_3, window_bounds = array<i64: 256, 128>}, {pipeline_mode = #tpu.pipeline_mode<synchronous>, transform_indices = @transform_4, window_bounds = array<i64: 1, 128>}, {transform_indices = @transform_5, window_bounds = array<i64: 8, 128>}]} {
    %c0 = arith.constant 0 : index
    %c0_0 = arith.constant 0 : index
    %c0_1 = arith.constant 0 : index
    %0 = vector.load %arg1[%c0, %c0_0, %c0_1] : memref<8x19x32xbf16, #tpu.memory_space<vmem>>, vector<8x16x32xbf16>
    %c0_2 = arith.constant 0 : index
    %c1 = arith.constant 1 : index
    %c0_3 = arith.constant 0 : index
    %1 = vector.load %arg1[%c0_2, %c1, %c0_3] : memref<8x19x32xbf16, #tpu.memory_space<vmem>>, vector<8x16x32xbf16>
    %c0_4 = arith.constant 0 : index
    %c2 = arith.constant 2 : index
    %c0_5 = arith.constant 0 : index
    %2 = vector.load %arg1[%c0_4, %c2, %c0_5] : memref<8x19x32xbf16, #tpu.memory_space<vmem>>, vector<8x16x32xbf16>
    %c0_6 = arith.constant 0 : index
    %c3 = arith.constant 3 : index
    %c0_7 = arith.constant 0 : index
    %3 = vector.load %arg1[%c0_6, %c3, %c0_7] : memref<8x19x32xbf16, #tpu.memory_space<vmem>>, vector<8x16x32xbf16>
    %4 = tpu.concatenate %0, %1, %2, %3 in 2 : vector<8x16x32xbf16>, vector<8x16x32xbf16>, vector<8x16x32xbf16>, vector<8x16x32xbf16> -> vector<8x16x128xbf16>
    %5 = vector.shape_cast %4 : vector<8x16x128xbf16> to vector<128x128xbf16>
    %c0_8 = arith.constant 0 : index
    %c0_9 = arith.constant 0 : index
    %6 = vector.load %arg2[%c0_8, %c0_9] : memref<128x256xbf16, #tpu.memory_space<vmem>>, vector<128x256xbf16>
    %cst = arith.constant dense<0.000000e+00> : vector<128x256xf32>
    %7 = tpu.matmul %5, %6, %cst {dimension_numbers = #tpu.dot_dimension_numbers<[1], [0], [0], [1], [0, 0, 1, 1], [], []>} : vector<128x128xbf16>, vector<128x256xbf16>, vector<128x256xf32> -> vector<128x256xf32>
    %8 = vector.shape_cast %7 : vector<128x256xf32> to vector<8x16x256xf32>
    %9 = vector.extract_strided_slice %8 {offsets = [0, 0, 0], sizes = [8, 15, 128], strides = [1, 1, 1]} : vector<8x16x256xf32> to vector<8x15x128xf32>
    %cst_10 = arith.constant dense<0xFF800000> : vector<8x128xf32>
    %10 = vector.multi_reduction <maximumf>, %9, %cst_10 [1] : vector<8x15x128xf32> to vector<8x128xf32>
    %11 = vector.extract_strided_slice %8 {offsets = [0, 0, 128], sizes = [8, 13, 128], strides = [1, 1, 1]} : vector<8x16x256xf32> to vector<8x13x128xf32>
    %cst_11 = arith.constant dense<0xFF800000> : vector<8x128xf32>
    %12 = vector.multi_reduction <maximumf>, %11, %cst_11 [1] : vector<8x13x128xf32> to vector<8x128xf32>
    %13 = tpu.concatenate %10, %12 in 1 : vector<8x128xf32>, vector<8x128xf32> -> vector<8x256xf32>
    %c0_12 = arith.constant 0 : index
    %c0_13 = arith.constant 0 : index
    %14 = vector.load %arg3[%c0_12, %c0_13] : memref<1x256xf32, #tpu.memory_space<vmem>>, vector<1x256xf32>
    %15 = vector.broadcast %14 : vector<1x256xf32> to vector<8x256xf32>
    %16 = arith.addf %13, %15 : vector<8x256xf32>
    %cst_14 = arith.constant 0.000000e+00 : f32
    %17 = vector.broadcast %cst_14 : f32 to vector<8x256xf32>
    %18 = arith.maximumf %16, %17 : vector<8x256xf32>
    %19 = arith.truncf %18 : vector<8x256xf32> to vector<8x256xbf16>
    %c0_15 = arith.constant 0 : index
    %c0_16 = arith.constant 0 : index
    %20 = vector.load %arg4[%c0_15, %c0_16] : memref<256x128xbf16, #tpu.memory_space<vmem>>, vector<256x128xbf16>
    %cst_17 = arith.constant dense<0.000000e+00> : vector<8x128xf32>
    %21 = tpu.matmul %19, %20, %cst_17 {dimension_numbers = #tpu.dot_dimension_numbers<[1], [0], [0], [1], [0, 0, 1, 1], [], []>} : vector<8x256xbf16>, vector<256x128xbf16>, vector<8x128xf32> -> vector<8x128xf32>
    %c0_18 = arith.constant 0 : index
    %c0_19 = arith.constant 0 : index
    %22 = vector.load %arg5[%c0_18, %c0_19] : memref<1x128xf32, #tpu.memory_space<vmem>>, vector<1x128xf32>
    %23 = vector.broadcast %22 : vector<1x128xf32> to vector<8x128xf32>
    %24 = arith.addf %21, %23 : vector<8x128xf32>
    %c0_20 = arith.constant 0 : index
    %c0_21 = arith.constant 0 : index
    %25 = vector.load %arg6[%c0_20, %c0_21] : memref<8x128xf32, #tpu.memory_space<vmem>>, vector<8x128xf32>
    tpu.vector_store %arg6[%c0_20, %c0_21], %24 {strides = array<i32>} : memref<8x128xf32, #tpu.memory_space<vmem>>, vector<8x128xf32>,
    return
  }
  func.func @transform_0(%arg0: i32) -> (i32, i32, i32) {
    %c0_i32 = arith.constant 0 : i32
    %c0_i32_0 = arith.constant 0 : i32
    %c0_i32_1 = arith.constant 0 : i32
    return %arg0, %c0_i32, %c0_i32_0 : i32, i32, i32
  }
  func.func @transform_1(%arg0: i32) -> (i32, i32) {
    %c0_i32 = arith.constant 0 : i32
    %c0_i32_0 = arith.constant 0 : i32
    %c0_i32_1 = arith.constant 0 : i32
    return %c0_i32, %c0_i32_0 : i32, i32
  }
  func.func @transform_2(%arg0: i32) -> (i32, i32) {
    %c0_i32 = arith.constant 0 : i32
    %c0_i32_0 = arith.constant 0 : i32
    %c0_i32_1 = arith.constant 0 : i32
    return %c0_i32, %c0_i32_0 : i32, i32
  }
  func.func @transform_3(%arg0: i32) -> (i32, i32) {
    %c0_i32 = arith.constant 0 : i32
    %c0_i32_0 = arith.constant 0 : i32
    %c0_i32_1 = arith.constant 0 : i32
    return %c0_i32, %c0_i32_0 : i32, i32
  }
  func.func @transform_4(%arg0: i32) -> (i32, i32) {
    %c0_i32 = arith.constant 0 : i32
    %c0_i32_0 = arith.constant 0 : i32
    %c0_i32_1 = arith.constant 0 : i32
    return %c0_i32, %c0_i32_0 : i32, i32
  }
  func.func @transform_5(%arg0: i32) -> (i32, i32) {
    %c0_i32 = arith.constant 0 : i32
    %c0_i32_0 = arith.constant 0 : i32
    return %arg0, %c0_i32 : i32, i32
  }
}

</mosaic_0001>

<llo_original>
// kernel: tpu_custom_call.1
$region0: #{tpu_custom_call.1}
  #allocation0 [shape = 'u32[]', space=smem, size = 0x4, offset = 0x4, fixed_abs, tag = 'smem constant byte address 0x4 - core index']
  #allocation1 [shape = 'u32[144,128]{1,0:T(1,128)}', space=vmem, size = 0x12000, scoped, tag = 'internal scratch']
  %s0 = inlined_call_operand.vmem [shape: bf16[8,19,32], index: 0, kind: input, shape index: {}]
  %s1 = inlined_call_operand.vmem [shape: bf16[128,256], index: 1, kind: input, shape index: {}]
  %s2 = inlined_call_operand.vmem [shape: f32[1,256], index: 2, kind: input, shape index: {}]
  %s3 = inlined_call_operand.hbm [shape: bf16[256,128], index: 3, kind: input, shape index: {}]
  %s4 = inlined_call_operand.vmem [shape: f32[1,128], index: 4, kind: input, shape index: {}]
  %s5 = inlined_call_operand.hbm [shape: f32[8,128], index: 5, kind: output, shape index: {}]
  %s6 = sld [smem:[#allocation0]]
  $region34: #{tpu_custom_call.1} parent=0
    _
  %s8 = ssub.s32 1, %s6
  %s9 = scalar_select 0, %s8, %s6
  $region1: #{tpu_custom_call.1} parent=0
    #allocation2 [shape = 'u8[65536]{0}', space=vmem, size = 0x10000, scoped, tag = 'input window, operand 3, single buffered']
    #allocation3 [shape = 's32[1]{0}', space=sflag, size = 0x4, scoped, tag = 'scoped memory for tpu_custom_call.1']
    #allocation4 [shape = 's32[1]{0}', space=sflag, size = 0x4, scoped, tag = 'scoped memory for tpu_custom_call.1']
    #allocation5 [shape = 'u8[4096]{0}', space=vmem, size = 0x1000, scoped, tag = 'output window, operand 0, single buffered']
    %10 = vsyncpa [#allocation3], 0
    %11 = vsyncpa [#allocation4], 0
    // Predicated region
    $region2: #{tpu_custom_call.1} parent=1 // pred_check
      _
    $region3: #{tpu_custom_call.1} parent=1 // pred_check_branch
      %13 = sbr.rel (0) target = $region5
    $region4: #{tpu_custom_call.1} parent=1 // pred_region
      _
    $region5: #{tpu_custom_call.1} parent=1 // pred_fallthru
      _
    // Predicated region
    $region6: #{tpu_custom_call.1} parent=1 // pred_check
      _
    $region7: #{tpu_custom_call.1} parent=1 // pred_check_branch
      %15 = sbr.rel (0) target = $region9
    $region8: #{tpu_custom_call.1} parent=1 // pred_region
      _
    $region9: #{tpu_custom_call.1} parent=1 // pred_fallthru
      _
    // Predicated region
    $region10: #{tpu_custom_call.1} parent=1 // pred_check
      _
    $region11: #{tpu_custom_call.1} parent=1 // pred_check_branch
      %17 = sbr.rel (0) target = $region13
    $region12: #{tpu_custom_call.1} parent=1 // pred_region
      _
    $region13: #{tpu_custom_call.1} parent=1 // pred_fallthru
      _
    // Predicated region
    $region14: #{tpu_custom_call.1} parent=1 // pred_check
      _
    $region15: #{tpu_custom_call.1} parent=1 // pred_check_branch
      %19 = sbr.rel (0) target = $region17
    $region16: #{tpu_custom_call.1} parent=1 // pred_region
      %s21 = ssub.s32 2048, 2048
      %22 = vsyncadd [#allocation3], %s21
      %s23 = sshll.u32 [#allocation2], 4
      %s24 = int_to_ptr.vmem [resolvable:$true] %s23
      %29 = dma.hbm_to_vmem [thread:$0]  %s3, 2048, %s24, [#allocation3], 64, 64, 4
    $region17: #{tpu_custom_call.1} parent=1 // pred_fallthru
      _
    // Predicated region
    $region18: #{tpu_custom_call.1} parent=1 // pred_check
      _
    $region19: #{tpu_custom_call.1} parent=1 // pred_check_branch
      %31 = sbr.rel (0) target = $region21
    $region20: #{tpu_custom_call.1} parent=1 // pred_region
      _
    $region21: #{tpu_custom_call.1} parent=1 // pred_fallthru
      _
    // Predicated region
    $region22: #{tpu_custom_call.1} parent=1 // pred_check
      _
    $region23: #{tpu_custom_call.1} parent=1 // pred_check_branch
      %33 = sbr.rel (0) target = $region25
    $region24: #{tpu_custom_call.1} parent=1 // pred_region
      %34 = dma.done [#allocation3], 2048
    $region25: #{tpu_custom_call.1} parent=1 // pred_fallthru
      _
    %v36 = vld [vmem:[%s0] sm:$0xf]
    %v37 = vld [vmem:[%s0 + $0x4] sm:$0xf]
    %v38 = vld [vmem:[%s0 + $0xc] sm:$0xf]
    %v39 = vld [vmem:[%s0 + $0x10] sm:$0xf]
    %v40 = vld [vmem:[%s0 + $0x18] sm:$0xf]
    %v41 = vld [vmem:[%s0 + $0x1c] sm:$0xf]
    %v42 = vld [vmem:[%s0 + $0x24] sm:$0xf]
    %v43 = vld [vmem:[%s0 + $0x28] sm:$0xf]
    %v44 = vld [vmem:[%s0 + $0x30] sm:$0xf]
    %v45 = vld [vmem:[%s0 + $0x34] sm:$0xf]
    %v46 = vld [vmem:[%s0 + $0x3c] sm:$0xf]
    %v47 = vld [vmem:[%s0 + $0x40] sm:$0xf]
    %v48 = vld [vmem:[%s0 + $0x48] sm:$0xf]
    %v49 = vld [vmem:[%s0 + $0x4c] sm:$0xf]
    %v50 = vld [vmem:[%s0 + $0x54] sm:$0xf]
    %v51 = vld [vmem:[%s0 + $0x58] sm:$0xf]
    %v52 = vld [vmem:[%s0 + $0x8] sm:$0x1]
    %v53 = vld [vmem:[%s0 + $0x14] sm:$0x1]
    %v54 = vld [vmem:[%s0 + $0x20] sm:$0x1]
    %v55 = vld [vmem:[%s0 + $0x2c] sm:$0x1]
    %v56 = vld [vmem:[%s0 + $0x38] sm:$0x1]
    %v57 = vld [vmem:[%s0 + $0x44] sm:$0x1]
    %v58 = vld [vmem:[%s0 + $0x50] sm:$0x1]
    %v59 = vld [vmem:[%s0 + $0x5c] sm:$0x1]
    %v60 = vld [vmem:[%s0] sm:$0xe]
    %v61 = vld [vmem:[%s0 + $0xc] sm:$0xe]
    %v62 = vld [vmem:[%s0 + $0x18] sm:$0xe]
    %v63 = vld [vmem:[%s0 + $0x24] sm:$0xe]
    %v64 = vld [vmem:[%s0 + $0x30] sm:$0xe]
    %v65 = vld [vmem:[%s0 + $0x3c] sm:$0xe]
    %v66 = vld [vmem:[%s0 + $0x48] sm:$0xe]
    %v67 = vld [vmem:[%s0 + $0x54] sm:$0xe]
    %v68 = vld [vmem:[%s0 + $0x8] sm:$0x3]
    %v69 = vld [vmem:[%s0 + $0x14] sm:$0x3]
    %v70 = vld [vmem:[%s0 + $0x20] sm:$0x3]
    %v71 = vld [vmem:[%s0 + $0x2c] sm:$0x3]
    %v72 = vld [vmem:[%s0 + $0x38] sm:$0x3]
    %v73 = vld [vmem:[%s0 + $0x44] sm:$0x3]
    %v74 = vld [vmem:[%s0 + $0x50] sm:$0x3]
    %v75 = vld [vmem:[%s0 + $0x5c] sm:$0x3]
    %v92 = vunpack.c.l.b16 %v36
    %v93 = vunpack.c.l.b16 %v37
    %v94 = vunpack.c.l.b16 %v38
    %v95 = vunpack.c.l.b16 %v39
    %v96 = vunpack.c.l.b16 %v40
    %v97 = vunpack.c.l.b16 %v41
    %v98 = vunpack.c.l.b16 %v42
    %v99 = vunpack.c.l.b16 %v43
    %v100 = vunpack.c.l.b16 %v44
    %v101 = vunpack.c.l.b16 %v45
    %v102 = vunpack.c.l.b16 %v46
    %v103 = vunpack.c.l.b16 %v47
    %v104 = vunpack.c.l.b16 %v48
    %v105 = vunpack.c.l.b16 %v49
    %v106 = vunpack.c.l.b16 %v50
    %v107 = vunpack.c.l.b16 %v51
    %v108 = vpack.c.b16 %v93, %v92
    %v109 = vpack.c.b16 %v95, %v94
    %v110 = vpack.c.b16 %v97, %v96
    %v111 = vpack.c.b16 %v99, %v98
    %v112 = vpack.c.b16 %v101, %v100
    %v113 = vpack.c.b16 %v103, %v102
    %v114 = vpack.c.b16 %v105, %v104
    %v115 = vpack.c.b16 %v107, %v106
    %v124 = vunpack.c.l.b16 %v52
    %v125 = vunpack.c.l.b16 %v53
    %v126 = vunpack.c.l.b16 %v54
    %v127 = vunpack.c.l.b16 %v55
    %v128 = vunpack.c.l.b16 %v56
    %v129 = vunpack.c.l.b16 %v57
    %v130 = vunpack.c.l.b16 %v58
    %v131 = vunpack.c.l.b16 %v59
    %v132 = vpack.c.b16 %v124, %v124
    %v133 = vpack.c.b16 %v125, %v125
    %v134 = vpack.c.b16 %v126, %v126
    %v135 = vpack.c.b16 %v127, %v127
    %v136 = vpack.c.b16 %v128, %v128
    %v137 = vpack.c.b16 %v129, %v129
    %v138 = vpack.c.b16 %v130, %v130
    %v139 = vpack.c.b16 %v131, %v131
    %vm140 = vsmask.f32 7424
    %v142 = vshrl.u32 %v108, 16
    %v144 = vshll.u32 %v108, 16
    %v146 = vrot.slane %v144, 1
    %v147 = vor.u32 %v142, %v146
    %v149 = vshll.u32 %v132, 16
    %v151 = vrot.slane %v149, 1
    %v152 = vsel %vm140, %v147, %v151
    %v154 = vshrl.u32 %v109, 16
    %v156 = vshll.u32 %v109, 16
    %v158 = vrot.slane %v156, 1
    %v159 = vor.u32 %v154, %v158
    %v161 = vshll.u32 %v133, 16
    %v163 = vrot.slane %v161, 1
    %v164 = vsel %vm140, %v159, %v163
    %v166 = vshrl.u32 %v110, 16
    %v168 = vshll.u32 %v110, 16
    %v170 = vrot.slane %v168, 1
    %v171 = vor.u32 %v166, %v170
    %v173 = vshll.u32 %v134, 16
    %v175 = vrot.slane %v173, 1
    %v176 = vsel %vm140, %v171, %v175
    %v178 = vshrl.u32 %v111, 16
    %v180 = vshll.u32 %v111, 16
    %v182 = vrot.slane %v180, 1
    %v183 = vor.u32 %v178, %v182
    %v185 = vshll.u32 %v135, 16
    %v187 = vrot.slane %v185, 1
    %v188 = vsel %vm140, %v183, %v187
    %v190 = vshrl.u32 %v112, 16
    %v192 = vshll.u32 %v112, 16
    %v194 = vrot.slane %v192, 1
    %v195 = vor.u32 %v190, %v194
    %v197 = vshll.u32 %v136, 16
    %v199 = vrot.slane %v197, 1
    %v200 = vsel %vm140, %v195, %v199
    %v202 = vshrl.u32 %v113, 16
    %v204 = vshll.u32 %v113, 16
    %v206 = vrot.slane %v204, 1
    %v207 = vor.u32 %v202, %v206
    %v209 = vshll.u32 %v137, 16
    %v211 = vrot.slane %v209, 1
    %v212 = vsel %vm140, %v207, %v211
    %v214 = vshrl.u32 %v114, 16
    %v216 = vshll.u32 %v114, 16
    %v218 = vrot.slane %v216, 1
    %v219 = vor.u32 %v214, %v218
    %v221 = vshll.u32 %v138, 16
    %v223 = vrot.slane %v221, 1
    %v224 = vsel %vm140, %v219, %v223
    %v226 = vshrl.u32 %v115, 16
    %v228 = vshll.u32 %v115, 16
    %v230 = vrot.slane %v228, 1
    %v231 = vor.u32 %v226, %v230
    %v233 = vshll.u32 %v139, 16
    %v235 = vrot.slane %v233, 1
    %v236 = vsel %vm140, %v231, %v235
    %237 = vrot.lane.b32.xlu0 %v152, 32
    %v238 = vpop.permute.xlu0 %237
    %239 = vrot.lane.b32.xlu0 %v164, 32
    %v240 = vpop.permute.xlu0 %239
    %241 = vrot.lane.b32.xlu0 %v176, 32
    %v242 = vpop.permute.xlu0 %241
    %243 = vrot.lane.b32.xlu0 %v188, 32
    %v244 = vpop.permute.xlu0 %243
    %245 = vrot.lane.b32.xlu0 %v200, 32
    %v246 = vpop.permute.xlu0 %245
    %247 = vrot.lane.b32.xlu0 %v212, 32
    %v248 = vpop.permute.xlu0 %247
    %249 = vrot.lane.b32.xlu0 %v224, 32
    %v250 = vpop.permute.xlu0 %249
    %251 = vrot.lane.b32.xlu0 %v236, 32
    %v252 = vpop.permute.xlu0 %251
    %v261 = vunpack.c.l.b16 %v60
    %v262 = vunpack.c.l.b16 %v61
    %v263 = vunpack.c.l.b16 %v62
    %v264 = vunpack.c.l.b16 %v63
    %v265 = vunpack.c.l.b16 %v64
    %v266 = vunpack.c.l.b16 %v65
    %v267 = vunpack.c.l.b16 %v66
    %v268 = vunpack.c.l.b16 %v67
    %v269 = vpack.c.b16 %v93, %v261
    %v270 = vpack.c.b16 %v95, %v262
    %v271 = vpack.c.b16 %v97, %v263
    %v272 = vpack.c.b16 %v99, %v264
    %v273 = vpack.c.b16 %v101, %v265
    %v274 = vpack.c.b16 %v103, %v266
    %v275 = vpack.c.b16 %v105, %v267
    %v276 = vpack.c.b16 %v107, %v268
    %vm277 = vcmask 1046528
    %v278 = vrot.slane %v269, 1
    %v279 = vrot.slane %v132, 1
    %v280 = vsel %vm277, %v278, %v279
    %v281 = vrot.slane %v270, 1
    %v282 = vrot.slane %v133, 1
    %v283 = vsel %vm277, %v281, %v282
    %v284 = vrot.slane %v271, 1
    %v285 = vrot.slane %v134, 1
    %v286 = vsel %vm277, %v284, %v285
    %v287 = vrot.slane %v272, 1
    %v288 = vrot.slane %v135, 1
    %v289 = vsel %vm277, %v287, %v288
    %v290 = vrot.slane %v273, 1
    %v291 = vrot.slane %v136, 1
    %v292 = vsel %vm277, %v290, %v291
    %v293 = vrot.slane %v274, 1
    %v294 = vrot.slane %v137, 1
    %v295 = vsel %vm277, %v293, %v294
    %v296 = vrot.slane %v275, 1
    %v297 = vrot.slane %v138, 1
    %v298 = vsel %vm277, %v296, %v297
    %v299 = vrot.slane %v276, 1
    %v300 = vrot.slane %v139, 1
    %v301 = vsel %vm277, %v299, %v300
    %302 = vrot.lane.b32.xlu0 %v280, 64
    %v303 = vpop.permute.xlu0 %302
    %304 = vrot.lane.b32.xlu0 %v283, 64
    %v305 = vpop.permute.xlu0 %304
    %306 = vrot.lane.b32.xlu0 %v286, 64
    %v307 = vpop.permute.xlu0 %306
    %308 = vrot.lane.b32.xlu0 %v289, 64
    %v309 = vpop.permute.xlu0 %308
    %310 = vrot.lane.b32.xlu0 %v292, 64
    %v311 = vpop.permute.xlu0 %310
    %312 = vrot.lane.b32.xlu0 %v295, 64
    %v313 = vpop.permute.xlu0 %312
    %314 = vrot.lane.b32.xlu0 %v298, 64
    %v315 = vpop.permute.xlu0 %314
    %316 = vrot.lane.b32.xlu0 %v301, 64
    %v317 = vpop.permute.xlu0 %316
    %v326 = vunpack.c.l.b16 %v68
    %v327 = vunpack.c.l.b16 %v69
    %v328 = vunpack.c.l.b16 %v70
    %v329 = vunpack.c.l.b16 %v71
    %v330 = vunpack.c.l.b16 %v72
    %v331 = vunpack.c.l.b16 %v73
    %v332 = vunpack.c.l.b16 %v74
    %v333 = vunpack.c.l.b16 %v75
    %v334 = vpack.c.b16 %v326, %v326
    %v335 = vpack.c.b16 %v327, %v327
    %v336 = vpack.c.b16 %v328, %v328
    %v337 = vpack.c.b16 %v329, %v329
    %v338 = vpack.c.b16 %v330, %v330
    %v339 = vpack.c.b16 %v331, %v331
    %v340 = vpack.c.b16 %v332, %v332
    %v341 = vpack.c.b16 %v333, %v333
    %vm342 = vsmask.f32 6400
    %v344 = vshrl.u32 %v269, 16
    %v346 = vrot.slane %v344, 1
    %v347 = vshll.u32 %v269, 16
    %v349 = vrot.slane %v347, 2
    %v350 = vor.u32 %v346, %v349
    %v352 = vshrl.u32 %v334, 16
    %v354 = vrot.slane %v352, 1
    %v355 = vshll.u32 %v334, 16
    %v357 = vrot.slane %v355, 2
    %v358 = vor.u32 %v354, %v357
    %v359 = vsel %vm342, %v350, %v358
    %v361 = vshrl.u32 %v270, 16
    %v363 = vrot.slane %v361, 1
    %v364 = vshll.u32 %v270, 16
    %v366 = vrot.slane %v364, 2
    %v367 = vor.u32 %v363, %v366
    %v369 = vshrl.u32 %v335, 16
    %v371 = vrot.slane %v369, 1
    %v372 = vshll.u32 %v335, 16
    %v374 = vrot.slane %v372, 2
    %v375 = vor.u32 %v371, %v374
    %v376 = vsel %vm342, %v367, %v375
    %v378 = vshrl.u32 %v271, 16
    %v380 = vrot.slane %v378, 1
    %v381 = vshll.u32 %v271, 16
    %v383 = vrot.slane %v381, 2
    %v384 = vor.u32 %v380, %v383
    %v386 = vshrl.u32 %v336, 16
    %v388 = vrot.slane %v386, 1
    %v389 = vshll.u32 %v336, 16
    %v391 = vrot.slane %v389, 2
    %v392 = vor.u32 %v388, %v391
    %v393 = vsel %vm342, %v384, %v392
    %v395 = vshrl.u32 %v272, 16
    %v397 = vrot.slane %v395, 1
    %v398 = vshll.u32 %v272, 16
    %v400 = vrot.slane %v398, 2
    %v401 = vor.u32 %v397, %v400
    %v403 = vshrl.u32 %v337, 16
    %v405 = vrot.slane %v403, 1
    %v406 = vshll.u32 %v337, 16
    %v408 = vrot.slane %v406, 2
    %v409 = vor.u32 %v405, %v408
    %v410 = vsel %vm342, %v401, %v409
    %v412 = vshrl.u32 %v273, 16
    %v414 = vrot.slane %v412, 1
    %v415 = vshll.u32 %v273, 16
    %v417 = vrot.slane %v415, 2
    %v418 = vor.u32 %v414, %v417
    %v420 = vshrl.u32 %v338, 16
    %v422 = vrot.slane %v420, 1
    %v423 = vshll.u32 %v338, 16
    %v425 = vrot.slane %v423, 2
    %v426 = vor.u32 %v422, %v425
    %v427 = vsel %vm342, %v418, %v426
    %v429 = vshrl.u32 %v274, 16
    %v431 = vrot.slane %v429, 1
    %v432 = vshll.u32 %v274, 16
    %v434 = vrot.slane %v432, 2
    %v435 = vor.u32 %v431, %v434
    %v437 = vshrl.u32 %v339, 16
    %v439 = vrot.slane %v437, 1
    %v440 = vshll.u32 %v339, 16
    %v442 = vrot.slane %v440, 2
    %v443 = vor.u32 %v439, %v442
    %v444 = vsel %vm342, %v435, %v443
    %v446 = vshrl.u32 %v275, 16
    %v448 = vrot.slane %v446, 1
    %v449 = vshll.u32 %v275, 16
    %v451 = vrot.slane %v449, 2
    %v452 = vor.u32 %v448, %v451
    %v454 = vshrl.u32 %v340, 16
    %v456 = vrot.slane %v454, 1
    %v457 = vshll.u32 %v340, 16
    %v459 = vrot.slane %v457, 2
    %v460 = vor.u32 %v456, %v459
    %v461 = vsel %vm342, %v452, %v460
    %v463 = vshrl.u32 %v276, 16
    %v465 = vrot.slane %v463, 1
    %v466 = vshll.u32 %v276, 16
    %v468 = vrot.slane %v466, 2
    %v469 = vor.u32 %v465, %v468
    %v471 = vshrl.u32 %v341, 16
    %v473 = vrot.slane %v471, 1
    %v474 = vshll.u32 %v341, 16
    %v476 = vrot.slane %v474, 2
    %v477 = vor.u32 %v473, %v476
    %v478 = vsel %vm342, %v469, %v477
    %479 = vrot.lane.b32.xlu0 %v359, 96
    %v480 = vpop.permute.xlu0 %479
    %481 = vrot.lane.b32.xlu0 %v376, 96
    %v482 = vpop.permute.xlu0 %481
    %483 = vrot.lane.b32.xlu0 %v393, 96
    %v484 = vpop.permute.xlu0 %483
    %485 = vrot.lane.b32.xlu0 %v410, 96
    %v486 = vpop.permute.xlu0 %485
    %487 = vrot.lane.b32.xlu0 %v427, 96
    %v488 = vpop.permute.xlu0 %487
    %489 = vrot.lane.b32.xlu0 %v444, 96
    %v490 = vpop.permute.xlu0 %489
    %491 = vrot.lane.b32.xlu0 %v461, 96
    %v492 = vpop.permute.xlu0 %491
    %493 = vrot.lane.b32.xlu0 %v478, 96
    %v494 = vpop.permute.xlu0 %493
    %vm495 = vcmask 261120
    %v497 = vsel %vm495, %v108, %v238
    %v499 = vsel %vm495, %v109, %v240
    %v501 = vsel %vm495, %v110, %v242
    %v503 = vsel %vm495, %v111, %v244
    %v505 = vsel %vm495, %v112, %v246
    %v507 = vsel %vm495, %v113, %v248
    %v509 = vsel %vm495, %v114, %v250
    %v511 = vsel %vm495, %v115, %v252
    %vm512 = vcmask 523264
    %v514 = vsel %vm512, %v497, %v303
    %v516 = vsel %vm512, %v499, %v305
    %v518 = vsel %vm512, %v501, %v307
    %v520 = vsel %vm512, %v503, %v309
    %v522 = vsel %vm512, %v505, %v311
    %v524 = vsel %vm512, %v507, %v313
    %v526 = vsel %vm512, %v509, %v315
    %v528 = vsel %vm512, %v511, %v317
    %vm529 = vcmask 785408
    %v531 = vsel %vm529, %v514, %v480
    %v534 = vsel %vm529, %v516, %v482
    %v537 = vsel %vm529, %v518, %v484
    %v540 = vsel %vm529, %v520, %v486
    %v543 = vsel %vm529, %v522, %v488
    %v546 = vsel %vm529, %v524, %v490
    %v549 = vsel %vm529, %v526, %v492
    %v552 = vsel %vm529, %v528, %v494
    %v554 = vld [vmem:[%s1] sm:$0xff]
    %v555 = vld [vmem:[%s1 + $0x8] sm:$0xff]
    %v556 = vld [vmem:[%s1 + $0x10] sm:$0xff]
    %v557 = vld [vmem:[%s1 + $0x18] sm:$0xff]
    %v558 = vld [vmem:[%s1 + $0x20] sm:$0xff]
    %v559 = vld [vmem:[%s1 + $0x28] sm:$0xff]
    %v560 = vld [vmem:[%s1 + $0x30] sm:$0xff]
    %v561 = vld [vmem:[%s1 + $0x38] sm:$0xff]
    %v562 = vld [vmem:[%s1 + $0x40] sm:$0xff]
    %v563 = vld [vmem:[%s1 + $0x48] sm:$0xff]
    %v564 = vld [vmem:[%s1 + $0x50] sm:$0xff]
    %v565 = vld [vmem:[%s1 + $0x58] sm:$0xff]
    %v566 = vld [vmem:[%s1 + $0x60] sm:$0xff]
    %v567 = vld [vmem:[%s1 + $0x68] sm:$0xff]
    %v568 = vld [vmem:[%s1 + $0x70] sm:$0xff]
    %v569 = vld [vmem:[%s1 + $0x78] sm:$0xff]
    %v586 = vunpack.c.l.b16 %v554
    %v587 = vunpack.c.h.b16 %v554
    %v588 = vunpack.c.l.b16 %v555
    %v589 = vunpack.c.h.b16 %v555
    %v590 = vunpack.c.l.b16 %v556
    %v591 = vunpack.c.h.b16 %v556
    %v592 = vunpack.c.l.b16 %v557
    %v593 = vunpack.c.h.b16 %v557
    %v594 = vunpack.c.l.b16 %v558
    %v595 = vunpack.c.h.b16 %v558
    %v596 = vunpack.c.l.b16 %v559
    %v597 = vunpack.c.h.b16 %v559
    %v598 = vunpack.c.l.b16 %v560
    %v599 = vunpack.c.h.b16 %v560
    %v600 = vunpack.c.l.b16 %v561
    %v601 = vunpack.c.h.b16 %v561
    %v602 = vunpack.c.l.b16 %v562
    %v603 = vunpack.c.h.b16 %v562
    %v604 = vunpack.c.l.b16 %v563
    %v605 = vunpack.c.h.b16 %v563
    %v606 = vunpack.c.l.b16 %v564
    %v607 = vunpack.c.h.b16 %v564
    %v608 = vunpack.c.l.b16 %v565
    %v609 = vunpack.c.h.b16 %v565
    %v610 = vunpack.c.l.b16 %v566
    %v611 = vunpack.c.h.b16 %v566
    %v612 = vunpack.c.l.b16 %v567
    %v613 = vunpack.c.h.b16 %v567
    %v614 = vunpack.c.l.b16 %v568
    %v615 = vunpack.c.h.b16 %v568
    %v616 = vunpack.c.l.b16 %v569
    %v617 = vunpack.c.h.b16 %v569
    %v618 = vpack.c.b16 %v588, %v586
    %v619 = vpack.c.b16 %v589, %v587
    %v620 = vpack.c.b16 %v592, %v590
    %v621 = vpack.c.b16 %v593, %v591
    %v622 = vpack.c.b16 %v596, %v594
    %v623 = vpack.c.b16 %v597, %v595
    %v624 = vpack.c.b16 %v600, %v598
    %v625 = vpack.c.b16 %v601, %v599
    %v626 = vpack.c.b16 %v604, %v602
    %v627 = vpack.c.b16 %v605, %v603
    %v628 = vpack.c.b16 %v608, %v606
    %v629 = vpack.c.b16 %v609, %v607
    %v630 = vpack.c.b16 %v612, %v610
    %v631 = vpack.c.b16 %v613, %v611
    %v632 = vpack.c.b16 %v616, %v614
    %v633 = vpack.c.b16 %v617, %v615
    %650 = vmatprep.subr.bf16.mxu0 %v633
    %651 = vmatpush1.bf16.msra.mxu0 %v632
    %652 = vmatprep.subr.bf16.mxu0 %v631
    %653 = vmatpush1.bf16.msra.mxu0 %v630
    %654 = vmatprep.subr.bf16.mxu0 %v629
    %655 = vmatpush1.bf16.msra.mxu0 %v628
    %656 = vmatprep.subr.bf16.mxu0 %v627
    %657 = vmatpush1.bf16.msra.mxu0 %v626
    %658 = vmatprep.subr.bf16.mxu0 %v625
    %659 = vmatpush1.bf16.msra.mxu0 %v624
    %660 = vmatprep.subr.bf16.mxu0 %v623
    %661 = vmatpush1.bf16.msra.mxu0 %v622
    %662 = vmatprep.subr.bf16.mxu0 %v621
    %663 = vmatpush1.bf16.msra.mxu0 %v620
    %664 = vmatprep.subr.bf16.mxu0 %v619
    %665 = vmatpush1.bf16.msra.mxu0 %v618
    %666 = vmatprep.subr.bf16.mxu0 0
    %667 = vmatpush2.bf16.msra.mxu0 0
    %668 = vmatprep.subr.bf16.mxu0 0
    %669 = vmatpush2.bf16.msra.mxu0 0
    %670 = vmatprep.subr.bf16.mxu0 0
    %671 = vmatpush2.bf16.msra.mxu0 0
    %672 = vmatprep.subr.bf16.mxu0 0
    %673 = vmatpush2.bf16.msra.mxu0 0
    %674 = vmatprep.subr.bf16.mxu0 0
    %675 = vmatpush2.bf16.msra.mxu0 0
    %676 = vmatprep.subr.bf16.mxu0 0
    %677 = vmatpush2.bf16.msra.mxu0 0
    %678 = vmatprep.subr.bf16.mxu0 0
    %679 = vmatpush2.bf16.msra.mxu0 0
    %680 = vmatprep.subr.bf16.mxu0 0
    %681 = vmatpush2.bf16.msra.mxu0 0
    %682 = vmatprep.mubr.bf16.mxu0 0
    %683 = vmatmul.mubr.bf16.gmra.mxu0 %v531
    %v684 = vpop.f32.mrf.mxu0
    %v685 = vadd.f32 0.0, %v684
    %v686 = vpop.f32.mrf.mxu0
    %v687 = vadd.f32 0.0, %v686
    %v688 = vpop.f32.mrf.mxu0
    %v689 = vadd.f32 0.0, %v688
    %v690 = vpop.f32.mrf.mxu0
    %v691 = vadd.f32 0.0, %v690
    %692 = vmatprep.mubr.bf16.mxu0 0
    %693 = vmatmul.mubr.bf16.gmra.mxu0 %v534
    %v694 = vpop.f32.mrf.mxu0
    %v695 = vadd.f32 0.0, %v694
    %v696 = vpop.f32.mrf.mxu0
    %v697 = vadd.f32 0.0, %v696
    %v698 = vpop.f32.mrf.mxu0
    %v699 = vadd.f32 0.0, %v698
    %v700 = vpop.f32.mrf.mxu0
    %v701 = vadd.f32 0.0, %v700
    %702 = vmatprep.mubr.bf16.mxu0 0
    %703 = vmatmul.mubr.bf16.gmra.mxu0 %v537
    %v704 = vpop.f32.mrf.mxu0
    %v705 = vadd.f32 0.0, %v704
    %v706 = vpop.f32.mrf.mxu0
    %v707 = vadd.f32 0.0, %v706
    %v708 = vpop.f32.mrf.mxu0
    %v709 = vadd.f32 0.0, %v708
    %v710 = vpop.f32.mrf.mxu0
    %v711 = vadd.f32 0.0, %v710
    %712 = vmatprep.mubr.bf16.mxu0 0
    %713 = vmatmul.mubr.bf16.gmra.mxu0 %v540
    %v714 = vpop.f32.mrf.mxu0
    %v715 = vadd.f32 0.0, %v714
    %v716 = vpop.f32.mrf.mxu0
    %v717 = vadd.f32 0.0, %v716
    %v718 = vpop.f32.mrf.mxu0
    %v719 = vadd.f32 0.0, %v718
    %v720 = vpop.f32.mrf.mxu0
    %v721 = vadd.f32 0.0, %v720
    %722 = vmatprep.mubr.bf16.mxu0 0
    %723 = vmatmul.mubr.bf16.gmra.mxu0 %v543
    %v724 = vpop.f32.mrf.mxu0
    %v725 = vadd.f32 0.0, %v724
    %v726 = vpop.f32.mrf.mxu0
    %v727 = vadd.f32 0.0, %v726
    %v728 = vpop.f32.mrf.mxu0
    %v729 = vadd.f32 0.0, %v728
    %v730 = vpop.f32.mrf.mxu0
    %v731 = vadd.f32 0.0, %v730
    %732 = vmatprep.mubr.bf16.mxu0 0
    %733 = vmatmul.mubr.bf16.gmra.mxu0 %v546
    %v734 = vpop.f32.mrf.mxu0
    %v735 = vadd.f32 0.0, %v734
    %v736 = vpop.f32.mrf.mxu0
    %v737 = vadd.f32 0.0, %v736
    %v738 = vpop.f32.mrf.mxu0
    %v739 = vadd.f32 0.0, %v738
    %v740 = vpop.f32.mrf.mxu0
    %v741 = vadd.f32 0.0, %v740
    %742 = vmatprep.mubr.bf16.mxu0 0
    %743 = vmatmul.mubr.bf16.gmra.mxu0 %v549
    %v744 = vpop.f32.mrf.mxu0
    %v745 = vadd.f32 0.0, %v744
    %v746 = vpop.f32.mrf.mxu0
    %v747 = vadd.f32 0.0, %v746
    %v748 = vpop.f32.mrf.mxu0
    %v749 = vadd.f32 0.0, %v748
    %v750 = vpop.f32.mrf.mxu0
    %v751 = vadd.f32 0.0, %v750
    %752 = vmatprep.mubr.bf16.mxu0 0
    %753 = vmatmul.mubr.bf16.gmra.mxu0 %v552
    %v754 = vpop.f32.mrf.mxu0
    %v755 = vadd.f32 0.0, %v754
    %v756 = vpop.f32.mrf.mxu0
    %v757 = vadd.f32 0.0, %v756
    %v758 = vpop.f32.mrf.mxu0
    %v759 = vadd.f32 0.0, %v758
    %v760 = vpop.f32.mrf.mxu0
    %v761 = vadd.f32 0.0, %v760
    %762 = vdwg.mxu0
    %vm763 = vcmask 1046528
    %v764 = vsel %vm763, %v689, -inf
    %v765 = vmax.f32 %v685, %v764
    %v766 = vrot.slane %v765, 4
    %v767 = vmax.f32 %v765, %v766
    %v768 = vrot.slane %v767, 2
    %v769 = vmax.f32 %v767, %v768
    %v770 = vrot.slane %v769, 1
    %v771 = vmax.f32 %v769, %v770
    %v772 = vsel %vm763, %v699, -inf
    %v773 = vmax.f32 %v695, %v772
    %v774 = vrot.slane %v773, 4
    %v775 = vmax.f32 %v773, %v774
    %v776 = vrot.slane %v775, 2
    %v777 = vmax.f32 %v775, %v776
    %v778 = vrot.slane %v777, 1
    %v779 = vmax.f32 %v777, %v778
    %v780 = vsel %vm763, %v709, -inf
    %v781 = vmax.f32 %v705, %v780
    %v782 = vrot.slane %v781, 4
    %v783 = vmax.f32 %v781, %v782
    %v784 = vrot.slane %v783, 2
    %v785 = vmax.f32 %v783, %v784
    %v786 = vrot.slane %v785, 1
    %v787 = vmax.f32 %v785, %v786
    %v788 = vsel %vm763, %v719, -inf
    %v789 = vmax.f32 %v715, %v788
    %v790 = vrot.slane %v789, 4
    %v791 = vmax.f32 %v789, %v790
    %v792 = vrot.slane %v791, 2
    %v793 = vmax.f32 %v791, %v792
    %v794 = vrot.slane %v793, 1
    %v795 = vmax.f32 %v793, %v794
    %v796 = vsel %vm763, %v729, -inf
    %v797 = vmax.f32 %v725, %v796
    %v798 = vrot.slane %v797, 4
    %v799 = vmax.f32 %v797, %v798
    %v800 = vrot.slane %v799, 2
    %v801 = vmax.f32 %v799, %v800
    %v802 = vrot.slane %v801, 1
    %v803 = vmax.f32 %v801, %v802
    %v804 = vsel %vm763, %v739, -inf
    %v805 = vmax.f32 %v735, %v804
    %v806 = vrot.slane %v805, 4
    %v807 = vmax.f32 %v805, %v806
    %v808 = vrot.slane %v807, 2
    %v809 = vmax.f32 %v807, %v808
    %v810 = vrot.slane %v809, 1
    %v811 = vmax.f32 %v809, %v810
    %v812 = vsel %vm763, %v749, -inf
    %v813 = vmax.f32 %v745, %v812
    %v814 = vrot.slane %v813, 4
    %v815 = vmax.f32 %v813, %v814
    %v816 = vrot.slane %v815, 2
    %v817 = vmax.f32 %v815, %v816
    %v818 = vrot.slane %v817, 1
    %v819 = vmax.f32 %v817, %v818
    %v820 = vsel %vm763, %v759, -inf
    %v821 = vmax.f32 %v755, %v820
    %v822 = vrot.slane %v821, 4
    %v823 = vmax.f32 %v821, %v822
    %v824 = vrot.slane %v823, 2
    %v825 = vmax.f32 %v823, %v824
    %v826 = vrot.slane %v825, 1
    %v827 = vmax.f32 %v825, %v826
    %vm828 = vcmask 1044480
    %v829 = vsel %vm828, %v691, -inf
    %v830 = vmax.f32 %v687, %v829
    %v831 = vrot.slane %v830, 4
    %v832 = vmax.f32 %v830, %v831
    %v833 = vrot.slane %v832, 2
    %v834 = vmax.f32 %v832, %v833
    %v835 = vrot.slane %v834, 1
    %v836 = vmax.f32 %v834, %v835
    %v837 = vsel %vm828, %v701, -inf
    %v838 = vmax.f32 %v697, %v837
    %v839 = vrot.slane %v838, 4
    %v840 = vmax.f32 %v838, %v839
    %v841 = vrot.slane %v840, 2
    %v842 = vmax.f32 %v840, %v841
    %v843 = vrot.slane %v842, 1
    %v844 = vmax.f32 %v842, %v843
    %v845 = vsel %vm828, %v711, -inf
    %v846 = vmax.f32 %v707, %v845
    %v847 = vrot.slane %v846, 4
    %v848 = vmax.f32 %v846, %v847
    %v849 = vrot.slane %v848, 2
    %v850 = vmax.f32 %v848, %v849
    %v851 = vrot.slane %v850, 1
    %v852 = vmax.f32 %v850, %v851
    %v853 = vsel %vm828, %v721, -inf
    %v854 = vmax.f32 %v717, %v853
    %v855 = vrot.slane %v854, 4
    %v856 = vmax.f32 %v854, %v855
    %v857 = vrot.slane %v856, 2
    %v858 = vmax.f32 %v856, %v857
    %v859 = vrot.slane %v858, 1
    %v860 = vmax.f32 %v858, %v859
    %v861 = vsel %vm828, %v731, -inf
    %v862 = vmax.f32 %v727, %v861
    %v863 = vrot.slane %v862, 4
    %v864 = vmax.f32 %v862, %v863
    %v865 = vrot.slane %v864, 2
    %v866 = vmax.f32 %v864, %v865
    %v867 = vrot.slane %v866, 1
    %v868 = vmax.f32 %v866, %v867
    %v869 = vsel %vm828, %v741, -inf
    %v870 = vmax.f32 %v737, %v869
    %v871 = vrot.slane %v870, 4
    %v872 = vmax.f32 %v870, %v871
    %v873 = vrot.slane %v872, 2
    %v874 = vmax.f32 %v872, %v873
    %v875 = vrot.slane %v874, 1
    %v876 = vmax.f32 %v874, %v875
    %v877 = vsel %vm828, %v751, -inf
    %v878 = vmax.f32 %v747, %v877
    %v879 = vrot.slane %v878, 4
    %v880 = vmax.f32 %v878, %v879
    %v881 = vrot.slane %v880, 2
    %v882 = vmax.f32 %v880, %v881
    %v883 = vrot.slane %v882, 1
    %v884 = vmax.f32 %v882, %v883
    %v885 = vsel %vm828, %v761, -inf
    %v886 = vmax.f32 %v757, %v885
    %v887 = vrot.slane %v886, 4
    %v888 = vmax.f32 %v886, %v887
    %v889 = vrot.slane %v888, 2
    %v890 = vmax.f32 %v888, %v889
    %v891 = vrot.slane %v890, 1
    %v892 = vmax.f32 %v890, %v891
    %vm901 = vcmask 1041409
    %v902 = vsel %vm901, %v779, %v771
    %vm903 = vcmask 1042434
    %v904 = vsel %vm903, %v787, %v902
    %vm905 = vcmask 1043459
    %v906 = vsel %vm905, %v795, %v904
    %vm907 = vcmask 1044484
    %v908 = vsel %vm907, %v803, %v906
    %vm909 = vcmask 1045509
    %v910 = vsel %vm909, %v811, %v908
    %vm911 = vcmask 1046534
    %v912 = vsel %vm911, %v819, %v910
    %vm913 = vcmask 1047559
    %v914 = vsel %vm913, %v827, %v912
    %v924 = vsel %vm901, %v844, %v836
    %v925 = vsel %vm903, %v852, %v924
    %v926 = vsel %vm905, %v860, %v925
    %v927 = vsel %vm907, %v868, %v926
    %v928 = vsel %vm909, %v876, %v927
    %v929 = vsel %vm911, %v884, %v928
    %v930 = vsel %vm913, %v892, %v929
    %v932 = vld [vmem:[%s2] sm:$0x3]
    %v934 = vlaneseq
    %v935 = vshrl.u32 %v934, 7
    %v936 = vsub.s32 0, %v935
    %v937 = vrot.slane %v932, %v936
    %v938 = vlaneseq
    %v939 = vshrl.u32 %v938, 7
    %v940 = vsub.s32 1, %v939
    %v941 = vrot.slane %v932, %v940
    %v944 = vadd.f32 %v914, %v937
    %v945 = vadd.f32 %v930, %v941
    %v946 = vmax.f32 %v944, 0.0
    %v947 = vmax.f32 %v945, 0.0
    %v948 = vpack.c.bf16 %v946, %v946
    %v949 = vpack.c.bf16 %v947, %v947
    %v950 = vld [vmem:[#allocation2] sm:$0xf]
    %v951 = vld [vmem:[#allocation2 + $0x4] sm:$0xf]
    %v952 = vld [vmem:[#allocation2 + $0x8] sm:$0xf]
    %v953 = vld [vmem:[#allocation2 + $0xc] sm:$0xf]
    %v954 = vld [vmem:[#allocation2 + $0x10] sm:$0xf]
    %v955 = vld [vmem:[#allocation2 + $0x14] sm:$0xf]
    %v956 = vld [vmem:[#allocation2 + $0x18] sm:$0xf]
    %v957 = vld [vmem:[#allocation2 + $0x1c] sm:$0xf]
    %v958 = vld [vmem:[#allocation2 + $0x20] sm:$0xf]
    %v959 = vld [vmem:[#allocation2 + $0x24] sm:$0xf]
    %v960 = vld [vmem:[#allocation2 + $0x28] sm:$0xf]
    %v961 = vld [vmem:[#allocation2 + $0x2c] sm:$0xf]
    %v962 = vld [vmem:[#allocation2 + $0x30] sm:$0xf]
    %v963 = vld [vmem:[#allocation2 + $0x34] sm:$0xf]
    %v964 = vld [vmem:[#allocation2 + $0x38] sm:$0xf]
    %v965 = vld [vmem:[#allocation2 + $0x3c] sm:$0xf]
    %v966 = vld [vmem:[#allocation2 + $0x40] sm:$0xf]
    %v967 = vld [vmem:[#allocation2 + $0x44] sm:$0xf]
    %v968 = vld [vmem:[#allocation2 + $0x48] sm:$0xf]
    %v969 = vld [vmem:[#allocation2 + $0x4c] sm:$0xf]
    %v970 = vld [vmem:[#allocation2 + $0x50] sm:$0xf]
    %v971 = vld [vmem:[#allocation2 + $0x54] sm:$0xf]
    %v972 = vld [vmem:[#allocation2 + $0x58] sm:$0xf]
    %v973 = vld [vmem:[#allocation2 + $0x5c] sm:$0xf]
    %v974 = vld [vmem:[#allocation2 + $0x60] sm:$0xf]
    %v975 = vld [vmem:[#allocation2 + $0x64] sm:$0xf]
    %v976 = vld [vmem:[#allocation2 + $0x68] sm:$0xf]
    %v977 = vld [vmem:[#allocation2 + $0x6c] sm:$0xf]
    %v978 = vld [vmem:[#allocation2 + $0x70] sm:$0xf]
    %v979 = vld [vmem:[#allocation2 + $0x74] sm:$0xf]
    %v980 = vld [vmem:[#allocation2 + $0x78] sm:$0xf]
    %v981 = vld [vmem:[#allocation2 + $0x7c] sm:$0xf]
    %v982 = vld [vmem:[%s4] sm:$0x1]
    %v984 = vlaneseq
    %v985 = vshrl.u32 %v984, 7
    %v986 = vsub.s32 0, %v985
    %v987 = vrot.slane %v982, %v986
    %v1021 = vunpack.c.l.b16 %v950
    %v1022 = vunpack.c.l.b16 %v951
    %v1023 = vunpack.c.l.b16 %v952
    %v1024 = vunpack.c.l.b16 %v953
    %v1025 = vunpack.c.l.b16 %v954
    %v1026 = vunpack.c.l.b16 %v955
    %v1027 = vunpack.c.l.b16 %v956
    %v1028 = vunpack.c.l.b16 %v957
    %v1029 = vunpack.c.l.b16 %v958
    %v1030 = vunpack.c.l.b16 %v959
    %v1031 = vunpack.c.l.b16 %v960
    %v1032 = vunpack.c.l.b16 %v961
    %v1033 = vunpack.c.l.b16 %v962
    %v1034 = vunpack.c.l.b16 %v963
    %v1035 = vunpack.c.l.b16 %v964
    %v1036 = vunpack.c.l.b16 %v965
    %v1037 = vunpack.c.l.b16 %v966
    %v1038 = vunpack.c.l.b16 %v967
    %v1039 = vunpack.c.l.b16 %v968
    %v1040 = vunpack.c.l.b16 %v969
    %v1041 = vunpack.c.l.b16 %v970
    %v1042 = vunpack.c.l.b16 %v971
    %v1043 = vunpack.c.l.b16 %v972
    %v1044 = vunpack.c.l.b16 %v973
    %v1045 = vunpack.c.l.b16 %v974
    %v1046 = vunpack.c.l.b16 %v975
    %v1047 = vunpack.c.l.b16 %v976
    %v1048 = vunpack.c.l.b16 %v977
    %v1049 = vunpack.c.l.b16 %v978
    %v1050 = vunpack.c.l.b16 %v979
    %v1051 = vunpack.c.l.b16 %v980
    %v1052 = vunpack.c.l.b16 %v981
    %v1053 = vpack.c.b16 %v1022, %v1021
    %v1054 = vpack.c.b16 %v1024, %v1023
    %v1055 = vpack.c.b16 %v1026, %v1025
    %v1056 = vpack.c.b16 %v1028, %v1027
    %v1057 = vpack.c.b16 %v1030, %v1029
    %v1058 = vpack.c.b16 %v1032, %v1031
    %v1059 = vpack.c.b16 %v1034, %v1033
    %v1060 = vpack.c.b16 %v1036, %v1035
    %v1061 = vpack.c.b16 %v1038, %v1037
    %v1062 = vpack.c.b16 %v1040, %v1039
    %v1063 = vpack.c.b16 %v1042, %v1041
    %v1064 = vpack.c.b16 %v1044, %v1043
    %v1065 = vpack.c.b16 %v1046, %v1045
    %v1066 = vpack.c.b16 %v1048, %v1047
    %v1067 = vpack.c.b16 %v1050, %v1049
    %v1068 = vpack.c.b16 %v1052, %v1051
    %1085 = vmatprep.subr.bf16.mxu0 0
    %1086 = vmatpush1.bf16.msra.mxu0 %v1060
    %1087 = vmatprep.subr.bf16.mxu0 0
    %1088 = vmatpush1.bf16.msra.mxu0 %v1059
    %1089 = vmatprep.subr.bf16.mxu0 0
    %1090 = vmatpush1.bf16.msra.mxu0 %v1058
    %1091 = vmatprep.subr.bf16.mxu0 0
    %1092 = vmatpush1.bf16.msra.mxu0 %v1057
    %1093 = vmatprep.subr.bf16.mxu0 0
    %1094 = vmatpush1.bf16.msra.mxu0 %v1056
    %1095 = vmatprep.subr.bf16.mxu0 0
    %1096 = vmatpush1.bf16.msra.mxu0 %v1055
    %1097 = vmatprep.subr.bf16.mxu0 0
    %1098 = vmatpush1.bf16.msra.mxu0 %v1054
    %1099 = vmatprep.subr.bf16.mxu0 0
    %1100 = vmatpush1.bf16.msra.mxu0 %v1053
    %1101 = vmatprep.subr.bf16.mxu0 0
    %1102 = vmatpush2.bf16.msra.mxu0 %v1068
    %1103 = vmatprep.subr.bf16.mxu0 0
    %1104 = vmatpush2.bf16.msra.mxu0 %v1067
    %1105 = vmatprep.subr.bf16.mxu0 0
    %1106 = vmatpush2.bf16.msra.mxu0 %v1066
    %1107 = vmatprep.subr.bf16.mxu0 0
    %1108 = vmatpush2.bf16.msra.mxu0 %v1065
    %1109 = vmatprep.subr.bf16.mxu0 0
    %1110 = vmatpush2.bf16.msra.mxu0 %v1064
    %1111 = vmatprep.subr.bf16.mxu0 0
    %1112 = vmatpush2.bf16.msra.mxu0 %v1063
    %1113 = vmatprep.subr.bf16.mxu0 0
    %1114 = vmatpush2.bf16.msra.mxu0 %v1062
    %1115 = vmatprep.subr.bf16.mxu0 0
    %1116 = vmatpush2.bf16.msra.mxu0 %v1061
    %1117 = vmatprep.mubr.bf16.mxu0 %v949
    %1118 = vmatmul.mubr.bf16.gmra.mxu0 %v948
    %v1119 = vpop.f32.mrf.mxu0
    %v1120 = vadd.f32 %v987, %v1119
    %v1121 = vpop.f32.mrf.mxu0
    %v1122 = vpop.f32.mrf.mxu0
    %v1123 = vpop.f32.mrf.mxu0
    %1124 = vdwg.mxu0
    %1125 = vst [vmem:[#allocation5] sm:$0xff] %v1120
    // Predicated region
    $region26: #{tpu_custom_call.1} parent=1 // pred_check
      _
    $region27: #{tpu_custom_call.1} parent=1 // pred_check_branch
      %1127 = sbr.rel (0) target = $region29
    $region28: #{tpu_custom_call.1} parent=1 // pred_region
      %s1129 = ssub.s32 128, 128
      %1130 = vsyncadd [#allocation4], %s1129
      %s1132 = sshll.u32 [#allocation5], 4
      %s1133 = int_to_ptr.vmem [resolvable:$true] %s1132
      %1135 = dma.vmem_to_hbm [thread:$0]  %s1133, 128, %s5, [#allocation4]
    $region29: #{tpu_custom_call.1} parent=1 // pred_fallthru
      _
    // Predicated region
    $region30: #{tpu_custom_call.1} parent=1 // pred_check
      _
    $region31: #{tpu_custom_call.1} parent=1 // pred_check_branch
      %1137 = sbr.rel (0) target = $region33
    $region32: #{tpu_custom_call.1} parent=1 // pred_region
      %1138 = dma.done [#allocation4], 128
    $region33: #{tpu_custom_call.1} parent=1 // pred_fallthru
      _
    %1139 = vsyncpa [#allocation3], 1
    %1140 = vsyncpa [#allocation4], 1

// kernel: tpu_custom_call.1
$region0: #{tpu_custom_call.1}
  #allocation0 [shape = 'u32[]', space=smem, size = 0x4, offset = 0x4, fixed_abs, tag = 'smem constant byte address 0x4 - core index']
  #allocation1 [shape = 'u32[144,128]{1,0:T(1,128)}', space=vmem, size = 0x12000, scoped, tag = 'internal scratch']
  %s0 = inlined_call_operand.vmem [shape: bf16[8,19,32], index: 0, kind: input, shape index: {}]
  %s1 = inlined_call_operand.vmem [shape: bf16[128,256], index: 1, kind: input, shape index: {}]
  %s2 = inlined_call_operand.vmem [shape: f32[1,256], index: 2, kind: input, shape index: {}]
  %s3 = inlined_call_operand.hbm [shape: bf16[256,128], index: 3, kind: input, shape index: {}]
  %s4 = inlined_call_operand.vmem [shape: f32[1,128], index: 4, kind: input, shape index: {}]
  %s5 = inlined_call_operand.hbm [shape: f32[8,128], index: 5, kind: output, shape index: {}]
  %s6 = sld [smem:[#allocation0]]
  $region34: #{tpu_custom_call.1} parent=0
    _
  %s8 = ssub.s32 1, %s6
  %s9 = scalar_select 0, %s8, %s6
  $region1: #{tpu_custom_call.1} parent=0
    #allocation2 [shape = 'u8[65536]{0}', space=vmem, size = 0x10000, scoped, tag = 'input window, operand 3, single buffered']
    #allocation3 [shape = 's32[1]{0}', space=sflag, size = 0x4, scoped, tag = 'scoped memory for tpu_custom_call.1']
    #allocation4 [shape = 's32[1]{0}', space=sflag, size = 0x4, scoped, tag = 'scoped memory for tpu_custom_call.1']
    #allocation5 [shape = 'u8[4096]{0}', space=vmem, size = 0x1000, scoped, tag = 'output window, operand 0, single buffered']
    %10 = vsyncpa [#allocation3], 0
    %11 = vsyncpa [#allocation4], 0
    // Predicated region
    $region2: #{tpu_custom_call.1} parent=1 // pred_check
      _
    $region3: #{tpu_custom_call.1} parent=1 // pred_check_branch
      %13 = sbr.rel (0) target = $region5
    $region4: #{tpu_custom_call.1} parent=1 // pred_region
      _
    $region5: #{tpu_custom_call.1} parent=1 // pred_fallthru
      _
    // Predicated region
    $region6: #{tpu_custom_call.1} parent=1 // pred_check
      _
    $region7: #{tpu_custom_call.1} parent=1 // pred_check_branch
      %15 = sbr.rel (0) target = $region9
    $region8: #{tpu_custom_call.1} parent=1 // pred_region
      _
    $region9: #{tpu_custom_call.1} parent=1 // pred_fallthru
      _
    // Predicated region
    $region10: #{tpu_custom_call.1} parent=1 // pred_check
      _
    $region11: #{tpu_custom_call.1} parent=1 // pred_check_branch
      %17 = sbr.rel (0) target = $region13
    $region12: #{tpu_custom_call.1} parent=1 // pred_region
      _
    $region13: #{tpu_custom_call.1} parent=1 // pred_fallthru
      _
    // Predicated region
    $region14: #{tpu_custom_call.1} parent=1 // pred_check
      _
    $region15: #{tpu_custom_call.1} parent=1 // pred_check_branch
      %19 = sbr.rel (0) target = $region17
    $region16: #{tpu_custom_call.1} parent=1 // pred_region
      %s21 = ssub.s32 2048, 2048
      %22 = vsyncadd [#allocation3], %s21
      %s23 = sshll.u32 [#allocation2], 4
      %s24 = int_to_ptr.vmem [resolvable:$true] %s23
      %29 = dma.hbm_to_vmem [thread:$0]  %s3, 2048, %s24, [#allocation3], 64, 64, 4
    $region17: #{tpu_custom_call.1} parent=1 // pred_fallthru
      _
    // Predicated region
    $region18: #{tpu_custom_call.1} parent=1 // pred_check
      _
    $region19: #{tpu_custom_call.1} parent=1 // pred_check_branch
      %31 = sbr.rel (0) target = $region21
    $region20: #{tpu_custom_call.1} parent=1 // pred_region
      _
    $region21: #{tpu_custom_call.1} parent=1 // pred_fallthru
      _
    // Predicated region
    $region22: #{tpu_custom_call.1} parent=1 // pred_check
      _
    $region23: #{tpu_custom_call.1} parent=1 // pred_check_branch
      %33 = sbr.rel (0) target = $region25
    $region24: #{tpu_custom_call.1} parent=1 // pred_region
      %34 = dma.done [#allocation3], 2048
    $region25: #{tpu_custom_call.1} parent=1 // pred_fallthru
      _
    %v36 = vld [vmem:[%s0] sm:$0xf]
    %v37 = vld [vmem:[%s0 + $0x4] sm:$0xf]
    %v38 = vld [vmem:[%s0 + $0xc] sm:$0xf]
    %v39 = vld [vmem:[%s0 + $0x10] sm:$0xf]
    %v40 = vld [vmem:[%s0 + $0x18] sm:$0xf]
    %v41 = vld [vmem:[%s0 + $0x1c] sm:$0xf]
    %v42 = vld [vmem:[%s0 + $0x24] sm:$0xf]
    %v43 = vld [vmem:[%s0 + $0x28] sm:$0xf]
    %v44 = vld [vmem:[%s0 + $0x30] sm:$0xf]
    %v45 = vld [vmem:[%s0 + $0x34] sm:$0xf]
    %v46 = vld [vmem:[%s0 + $0x3c] sm:$0xf]
    %v47 = vld [vmem:[%s0 + $0x40] sm:$0xf]
    %v48 = vld [vmem:[%s0 + $0x48] sm:$0xf]
    %v49 = vld [vmem:[%s0 + $0x4c] sm:$0xf]
    %v50 = vld [vmem:[%s0 + $0x54] sm:$0xf]
    %v51 = vld [vmem:[%s0 + $0x58] sm:$0xf]
    %v52 = vld [vmem:[%s0 + $0x8] sm:$0x1]
    %v53 = vld [vmem:[%s0 + $0x14] sm:$0x1]
    %v54 = vld [vmem:[%s0 + $0x20] sm:$0x1]
    %v55 = vld [vmem:[%s0 + $0x2c] sm:$0x1]
    %v56 = vld [vmem:[%s0 + $0x38] sm:$0x1]
    %v57 = vld [vmem:[%s0 + $0x44] sm:$0x1]
    %v58 = vld [vmem:[%s0 + $0x50] sm:$0x1]
    %v59 = vld [vmem:[%s0 + $0x5c] sm:$0x1]
    %v60 = vld [vmem:[%s0] sm:$0xe]
    %v61 = vld [vmem:[%s0 + $0xc] sm:$0xe]
    %v62 = vld [vmem:[%s0 + $0x18] sm:$0xe]
    %v63 = vld [vmem:[%s0 + $0x24] sm:$0xe]
    %v64 = vld [vmem:[%s0 + $0x30] sm:$0xe]
    %v65 = vld [vmem:[%s0 + $0x3c] sm:$0xe]
    %v66 = vld [vmem:[%s0 + $0x48] sm:$0xe]
    %v67 = vld [vmem:[%s0 + $0x54] sm:$0xe]
    %v68 = vld [vmem:[%s0 + $0x8] sm:$0x3]
    %v69 = vld [vmem:[%s0 + $0x14] sm:$0x3]
    %v70 = vld [vmem:[%s0 + $0x20] sm:$0x3]
    %v71 = vld [vmem:[%s0 + $0x2c] sm:$0x3]
    %v72 = vld [vmem:[%s0 + $0x38] sm:$0x3]
    %v73 = vld [vmem:[%s0 + $0x44] sm:$0x3]
    %v74 = vld [vmem:[%s0 + $0x50] sm:$0x3]
    %v75 = vld [vmem:[%s0 + $0x5c] sm:$0x3]
    %v92 = vunpack.c.l.b16 %v36
    %v93 = vunpack.c.l.b16 %v37
    %v94 = vunpack.c.l.b16 %v38
    %v95 = vunpack.c.l.b16 %v39
    %v96 = vunpack.c.l.b16 %v40
    %v97 = vunpack.c.l.b16 %v41
    %v98 = vunpack.c.l.b16 %v42
    %v99 = vunpack.c.l.b16 %v43
    %v100 = vunpack.c.l.b16 %v44
    %v101 = vunpack.c.l.b16 %v45
    %v102 = vunpack.c.l.b16 %v46
    %v103 = vunpack.c.l.b16 %v47
    %v104 = vunpack.c.l.b16 %v48
    %v105 = vunpack.c.l.b16 %v49
    %v106 = vunpack.c.l.b16 %v50
    %v107 = vunpack.c.l.b16 %v51
    %v108 = vpack.c.b16 %v93, %v92
    %v109 = vpack.c.b16 %v95, %v94
    %v110 = vpack.c.b16 %v97, %v96
    %v111 = vpack.c.b16 %v99, %v98
    %v112 = vpack.c.b16 %v101, %v100
    %v113 = vpack.c.b16 %v103, %v102
    %v114 = vpack.c.b16 %v105, %v104
    %v115 = vpack.c.b16 %v107, %v106
    %v124 = vunpack.c.l.b16 %v52
    %v125 = vunpack.c.l.b16 %v53
    %v126 = vunpack.c.l.b16 %v54
    %v127 = vunpack.c.l.b16 %v55
    %v128 = vunpack.c.l.b16 %v56
    %v129 = vunpack.c.l.b16 %v57
    %v130 = vunpack.c.l.b16 %v58
    %v131 = vunpack.c.l.b16 %v59
    %v132 = vpack.c.b16 %v124, %v124
    %v133 = vpack.c.b16 %v125, %v125
    %v134 = vpack.c.b16 %v126, %v126
    %v135 = vpack.c.b16 %v127, %v127
    %v136 = vpack.c.b16 %v128, %v128
    %v137 = vpack.c.b16 %v129, %v129
    %v138 = vpack.c.b16 %v130, %v130
    %v139 = vpack.c.b16 %v131, %v131
    %vm140 = vsmask.f32 7424
    %v142 = vshrl.u32 %v108, 16
    %v144 = vshll.u32 %v108, 16
    %v146 = vrot.slane %v144, 1
    %v147 = vor.u32 %v142, %v146
    %v149 = vshll.u32 %v132, 16
    %v151 = vrot.slane %v149, 1
    %v152 = vsel %vm140, %v147, %v151
    %v154 = vshrl.u32 %v109, 16
    %v156 = vshll.u32 %v109, 16
    %v158 = vrot.slane %v156, 1
    %v159 = vor.u32 %v154, %v158
    %v161 = vshll.u32 %v133, 16
    %v163 = vrot.slane %v161, 1
    %v164 = vsel %vm140, %v159, %v163
    %v166 = vshrl.u32 %v110, 16
    %v168 = vshll.u32 %v110, 16
    %v170 = vrot.slane %v168, 1
    %v171 = vor.u32 %v166, %v170
    %v173 = vshll.u32 %v134, 16
    %v175 = vrot.slane %v173, 1
    %v176 = vsel %vm140, %v171, %v175
    %v178 = vshrl.u32 %v111, 16
    %v180 = vshll.u32 %v111, 16
    %v182 = vrot.slane %v180, 1
    %v183 = vor.u32 %v178, %v182
    %v185 = vshll.u32 %v135, 16
    %v187 = vrot.slane %v185, 1
    %v188 = vsel %vm140, %v183, %v187
    %v190 = vshrl.u32 %v112, 16
    %v192 = vshll.u32 %v112, 16
    %v194 = vrot.slane %v192, 1
    %v195 = vor.u32 %v190, %v194
    %v197 = vshll.u32 %v136, 16
    %v199 = vrot.slane %v197, 1
    %v200 = vsel %vm140, %v195, %v199
    %v202 = vshrl.u32 %v113, 16
    %v204 = vshll.u32 %v113, 16
    %v206 = vrot.slane %v204, 1
    %v207 = vor.u32 %v202, %v206
    %v209 = vshll.u32 %v137, 16
    %v211 = vrot.slane %v209, 1
    %v212 = vsel %vm140, %v207, %v211
    %v214 = vshrl.u32 %v114, 16
    %v216 = vshll.u32 %v114, 16
    %v218 = vrot.slane %v216, 1
    %v219 = vor.u32 %v214, %v218
    %v221 = vshll.u32 %v138, 16
    %v223 = vrot.slane %v221, 1
    %v224 = vsel %vm140, %v219, %v223
    %v226 = vshrl.u32 %v115, 16
    %v228 = vshll.u32 %v115, 16
    %v230 = vrot.slane %v228, 1
    %v231 = vor.u32 %v226, %v230
    %v233 = vshll.u32 %v139, 16
    %v235 = vrot.slane %v233, 1
    %v236 = vsel %vm140, %v231, %v235
    %237 = vrot.lane.b32.xlu0 %v152, 32
    %v238 = vpop.permute.xlu0 %237
    %239 = vrot.lane.b32.xlu0 %v164, 32
    %v240 = vpop.permute.xlu0 %239
    %241 = vrot.lane.b32.xlu0 %v176, 32
    %v242 = vpop.permute.xlu0 %241
    %243 = vrot.lane.b32.xlu0 %v188, 32
    %v244 = vpop.permute.xlu0 %243
    %245 = vrot.lane.b32.xlu0 %v200, 32
    %v246 = vpop.permute.xlu0 %245
    %247 = vrot.lane.b32.xlu0 %v212, 32
    %v248 = vpop.permute.xlu0 %247
    %249 = vrot.lane.b32.xlu0 %v224, 32
    %v250 = vpop.permute.xlu0 %249
    %251 = vrot.lane.b32.xlu0 %v236, 32
    %v252 = vpop.permute.xlu0 %251
    %v261 = vunpack.c.l.b16 %v60
    %v262 = vunpack.c.l.b16 %v61
    %v263 = vunpack.c.l.b16 %v62
    %v264 = vunpack.c.l.b16 %v63
    %v265 = vunpack.c.l.b16 %v64
    %v266 = vunpack.c.l.b16 %v65
    %v267 = vunpack.c.l.b16 %v66
    %v268 = vunpack.c.l.b16 %v67
    %v269 = vpack.c.b16 %v93, %v261
    %v270 = vpack.c.b16 %v95, %v262
    %v271 = vpack.c.b16 %v97, %v263
    %v272 = vpack.c.b16 %v99, %v264
    %v273 = vpack.c.b16 %v101, %v265
    %v274 = vpack.c.b16 %v103, %v266
    %v275 = vpack.c.b16 %v105, %v267
    %v276 = vpack.c.b16 %v107, %v268
    %vm277 = vcmask 1046528
    %v278 = vrot.slane %v269, 1
    %v279 = vrot.slane %v132, 1
    %v280 = vsel %vm277, %v278, %v279
    %v281 = vrot.slane %v270, 1
    %v282 = vrot.slane %v133, 1
    %v283 = vsel %vm277, %v281, %v282
    %v284 = vrot.slane %v271, 1
    %v285 = vrot.slane %v134, 1
    %v286 = vsel %vm277, %v284, %v285
    %v287 = vrot.slane %v272, 1
    %v288 = vrot.slane %v135, 1
    %v289 = vsel %vm277, %v287, %v288
    %v290 = vrot.slane %v273, 1
    %v291 = vrot.slane %v136, 1
    %v292 = vsel %vm277, %v290, %v291
    %v293 = vrot.slane %v274, 1
    %v294 = vrot.slane %v137, 1
    %v295 = vsel %vm277, %v293, %v294
    %v296 = vrot.slane %v275, 1
    %v297 = vrot.slane %v138, 1
    %v298 = vsel %vm277, %v296, %v297
    %v299 = vrot.slane %v276, 1
    %v300 = vrot.slane %v139, 1
    %v301 = vsel %vm277, %v299, %v300
    %302 = vrot.lane.b32.xlu0 %v280, 64
    %v303 = vpop.permute.xlu0 %302
    %304 = vrot.lane.b32.xlu0 %v283, 64
    %v305 = vpop.permute.xlu0 %304
    %306 = vrot.lane.b32.xlu0 %v286, 64
    %v307 = vpop.permute.xlu0 %306
    %308 = vrot.lane.b32.xlu0 %v289, 64
    %v309 = vpop.permute.xlu0 %308
    %310 = vrot.lane.b32.xlu0 %v292, 64
    %v311 = vpop.permute.xlu0 %310
    %312 = vrot.lane.b32.xlu0 %v295, 64
    %v313 = vpop.permute.xlu0 %312
    %314 = vrot.lane.b32.xlu0 %v298, 64
    %v315 = vpop.permute.xlu0 %314
    %316 = vrot.lane.b32.xlu0 %v301, 64
    %v317 = vpop.permute.xlu0 %316
    %v326 = vunpack.c.l.b16 %v68
    %v327 = vunpack.c.l.b16 %v69
    %v328 = vunpack.c.l.b16 %v70
    %v329 = vunpack.c.l.b16 %v71
    %v330 = vunpack.c.l.b16 %v72
    %v331 = vunpack.c.l.b16 %v73
    %v332 = vunpack.c.l.b16 %v74
    %v333 = vunpack.c.l.b16 %v75
    %v334 = vpack.c.b16 %v326, %v326
    %v335 = vpack.c.b16 %v327, %v327
    %v336 = vpack.c.b16 %v328, %v328
    %v337 = vpack.c.b16 %v329, %v329
    %v338 = vpack.c.b16 %v330, %v330
    %v339 = vpack.c.b16 %v331, %v331
    %v340 = vpack.c.b16 %v332, %v332
    %v341 = vpack.c.b16 %v333, %v333
    %vm342 = vsmask.f32 6400
    %v344 = vshrl.u32 %v269, 16
    %v346 = vrot.slane %v344, 1
    %v347 = vshll.u32 %v269, 16
    %v349 = vrot.slane %v347, 2
    %v350 = vor.u32 %v346, %v349
    %v352 = vshrl.u32 %v334, 16
    %v354 = vrot.slane %v352, 1
    %v355 = vshll.u32 %v334, 16
    %v357 = vrot.slane %v355, 2
    %v358 = vor.u32 %v354, %v357
    %v359 = vsel %vm342, %v350, %v358
    %v361 = vshrl.u32 %v270, 16
    %v363 = vrot.slane %v361, 1
    %v364 = vshll.u32 %v270, 16
    %v366 = vrot.slane %v364, 2
    %v367 = vor.u32 %v363, %v366
    %v369 = vshrl.u32 %v335, 16
    %v371 = vrot.slane %v369, 1
    %v372 = vshll.u32 %v335, 16
    %v374 = vrot.slane %v372, 2
    %v375 = vor.u32 %v371, %v374
    %v376 = vsel %vm342, %v367, %v375
    %v378 = vshrl.u32 %v271, 16
    %v380 = vrot.slane %v378, 1
    %v381 = vshll.u32 %v271, 16
    %v383 = vrot.slane %v381, 2
    %v384 = vor.u32 %v380, %v383
    %v386 = vshrl.u32 %v336, 16
    %v388 = vrot.slane %v386, 1
    %v389 = vshll.u32 %v336, 16
    %v391 = vrot.slane %v389, 2
    %v392 = vor.u32 %v388, %v391
    %v393 = vsel %vm342, %v384, %v392
    %v395 = vshrl.u32 %v272, 16
    %v397 = vrot.slane %v395, 1
    %v398 = vshll.u32 %v272, 16
    %v400 = vrot.slane %v398, 2
    %v401 = vor.u32 %v397, %v400
    %v403 = vshrl.u32 %v337, 16
    %v405 = vrot.slane %v403, 1
    %v406 = vshll.u32 %v337, 16
    %v408 = vrot.slane %v406, 2
    %v409 = vor.u32 %v405, %v408
    %v410 = vsel %vm342, %v401, %v409
    %v412 = vshrl.u32 %v273, 16
    %v414 = vrot.slane %v412, 1
    %v415 = vshll.u32 %v273, 16
    %v417 = vrot.slane %v415, 2
    %v418 = vor.u32 %v414, %v417
    %v420 = vshrl.u32 %v338, 16
    %v422 = vrot.slane %v420, 1
    %v423 = vshll.u32 %v338, 16
    %v425 = vrot.slane %v423, 2
    %v426 = vor.u32 %v422, %v425
    %v427 = vsel %vm342, %v418, %v426
    %v429 = vshrl.u32 %v274, 16
    %v431 = vrot.slane %v429, 1
    %v432 = vshll.u32 %v274, 16
    %v434 = vrot.slane %v432, 2
    %v435 = vor.u32 %v431, %v434
    %v437 = vshrl.u32 %v339, 16
    %v439 = vrot.slane %v437, 1
    %v440 = vshll.u32 %v339, 16
    %v442 = vrot.slane %v440, 2
    %v443 = vor.u32 %v439, %v442
    %v444 = vsel %vm342, %v435, %v443
    %v446 = vshrl.u32 %v275, 16
    %v448 = vrot.slane %v446, 1
    %v449 = vshll.u32 %v275, 16
    %v451 = vrot.slane %v449, 2
    %v452 = vor.u32 %v448, %v451
    %v454 = vshrl.u32 %v340, 16
    %v456 = vrot.slane %v454, 1
    %v457 = vshll.u32 %v340, 16
    %v459 = vrot.slane %v457, 2
    %v460 = vor.u32 %v456, %v459
    %v461 = vsel %vm342, %v452, %v460
    %v463 = vshrl.u32 %v276, 16
    %v465 = vrot.slane %v463, 1
    %v466 = vshll.u32 %v276, 16
    %v468 = vrot.slane %v466, 2
    %v469 = vor.u32 %v465, %v468
    %v471 = vshrl.u32 %v341, 16
    %v473 = vrot.slane %v471, 1
    %v474 = vshll.u32 %v341, 16
    %v476 = vrot.slane %v474, 2
    %v477 = vor.u32 %v473, %v476
    %v478 = vsel %vm342, %v469, %v477
    %479 = vrot.lane.b32.xlu0 %v359, 96
    %v480 = vpop.permute.xlu0 %479
    %481 = vrot.lane.b32.xlu0 %v376, 96
    %v482 = vpop.permute.xlu0 %481
    %483 = vrot.lane.b32.xlu0 %v393, 96
    %v484 = vpop.permute.xlu0 %483
    %485 = vrot.lane.b32.xlu0 %v410, 96
    %v486 = vpop.permute.xlu0 %485
    %487 = vrot.lane.b32.xlu0 %v427, 96
    %v488 = vpop.permute.xlu0 %487
    %489 = vrot.lane.b32.xlu0 %v444, 96
    %v490 = vpop.permute.xlu0 %489
    %491 = vrot.lane.b32.xlu0 %v461, 96
    %v492 = vpop.permute.xlu0 %491
    %493 = vrot.lane.b32.xlu0 %v478, 96
    %v494 = vpop.permute.xlu0 %493
    %vm495 = vcmask 261120
    %v497 = vsel %vm495, %v108, %v238
    %v499 = vsel %vm495, %v109, %v240
    %v501 = vsel %vm495, %v110, %v242
    %v503 = vsel %vm495, %v111, %v244
    %v505 = vsel %vm495, %v112, %v246
    %v507 = vsel %vm495, %v113, %v248
    %v509 = vsel %vm495, %v114, %v250
    %v511 = vsel %vm495, %v115, %v252
    %vm512 = vcmask 523264
    %v514 = vsel %vm512, %v497, %v303
    %v516 = vsel %vm512, %v499, %v305
    %v518 = vsel %vm512, %v501, %v307
    %v520 = vsel %vm512, %v503, %v309
    %v522 = vsel %vm512, %v505, %v311
    %v524 = vsel %vm512, %v507, %v313
    %v526 = vsel %vm512, %v509, %v315
    %v528 = vsel %vm512, %v511, %v317
    %vm529 = vcmask 785408
    %v531 = vsel %vm529, %v514, %v480
    %v534 = vsel %vm529, %v516, %v482
    %v537 = vsel %vm529, %v518, %v484
    %v540 = vsel %vm529, %v520, %v486
    %v543 = vsel %vm529, %v522, %v488
    %v546 = vsel %vm529, %v524, %v490
    %v549 = vsel %vm529, %v526, %v492
    %v552 = vsel %vm529, %v528, %v494
    %v554 = vld [vmem:[%s1] sm:$0xff]
    %v555 = vld [vmem:[%s1 + $0x8] sm:$0xff]
    %v556 = vld [vmem:[%s1 + $0x10] sm:$0xff]
    %v557 = vld [vmem:[%s1 + $0x18] sm:$0xff]
    %v558 = vld [vmem:[%s1 + $0x20] sm:$0xff]
    %v559 = vld [vmem:[%s1 + $0x28] sm:$0xff]
    %v560 = vld [vmem:[%s1 + $0x30] sm:$0xff]
    %v561 = vld [vmem:[%s1 + $0x38] sm:$0xff]
    %v562 = vld [vmem:[%s1 + $0x40] sm:$0xff]
    %v563 = vld [vmem:[%s1 + $0x48] sm:$0xff]
    %v564 = vld [vmem:[%s1 + $0x50] sm:$0xff]
    %v565 = vld [vmem:[%s1 + $0x58] sm:$0xff]
    %v566 = vld [vmem:[%s1 + $0x60] sm:$0xff]
    %v567 = vld [vmem:[%s1 + $0x68] sm:$0xff]
    %v568 = vld [vmem:[%s1 + $0x70] sm:$0xff]
    %v569 = vld [vmem:[%s1 + $0x78] sm:$0xff]
    %v586 = vunpack.c.l.b16 %v554
    %v587 = vunpack.c.h.b16 %v554
    %v588 = vunpack.c.l.b16 %v555
    %v589 = vunpack.c.h.b16 %v555
    %v590 = vunpack.c.l.b16 %v556
    %v591 = vunpack.c.h.b16 %v556
    %v592 = vunpack.c.l.b16 %v557
    %v593 = vunpack.c.h.b16 %v557
    %v594 = vunpack.c.l.b16 %v558
    %v595 = vunpack.c.h.b16 %v558
    %v596 = vunpack.c.l.b16 %v559
    %v597 = vunpack.c.h.b16 %v559
    %v598 = vunpack.c.l.b16 %v560
    %v599 = vunpack.c.h.b16 %v560
    %v600 = vunpack.c.l.b16 %v561
    %v601 = vunpack.c.h.b16 %v561
    %v602 = vunpack.c.l.b16 %v562
    %v603 = vunpack.c.h.b16 %v562
    %v604 = vunpack.c.l.b16 %v563
    %v605 = vunpack.c.h.b16 %v563
    %v606 = vunpack.c.l.b16 %v564
    %v607 = vunpack.c.h.b16 %v564
    %v608 = vunpack.c.l.b16 %v565
    %v609 = vunpack.c.h.b16 %v565
    %v610 = vunpack.c.l.b16 %v566
    %v611 = vunpack.c.h.b16 %v566
    %v612 = vunpack.c.l.b16 %v567
    %v613 = vunpack.c.h.b16 %v567
    %v614 = vunpack.c.l.b16 %v568
    %v615 = vunpack.c.h.b16 %v568
    %v616 = vunpack.c.l.b16 %v569
    %v617 = vunpack.c.h.b16 %v569
    %v618 = vpack.c.b16 %v588, %v586
    %v619 = vpack.c.b16 %v589, %v587
    %v620 = vpack.c.b16 %v592, %v590
    %v621 = vpack.c.b16 %v593, %v591
    %v622 = vpack.c.b16 %v596, %v594
    %v623 = vpack.c.b16 %v597, %v595
    %v624 = vpack.c.b16 %v600, %v598
    %v625 = vpack.c.b16 %v601, %v599
    %v626 = vpack.c.b16 %v604, %v602
    %v627 = vpack.c.b16 %v605, %v603
    %v628 = vpack.c.b16 %v608, %v606
    %v629 = vpack.c.b16 %v609, %v607
    %v630 = vpack.c.b16 %v612, %v610
    %v631 = vpack.c.b16 %v613, %v611
    %v632 = vpack.c.b16 %v616, %v614
    %v633 = vpack.c.b16 %v617, %v615
    %650 = vmatprep.subr.bf16.mxu0 %v633
    %651 = vmatpush1.bf16.msra.mxu0 %v632
    %652 = vmatprep.subr.bf16.mxu0 %v631
    %653 = vmatpush1.bf16.msra.mxu0 %v630
    %654 = vmatprep.subr.bf16.mxu0 %v629
    %655 = vmatpush1.bf16.msra.mxu0 %v628
    %656 = vmatprep.subr.bf16.mxu0 %v627
    %657 = vmatpush1.bf16.msra.mxu0 %v626
    %658 = vmatprep.subr.bf16.mxu0 %v625
    %659 = vmatpush1.bf16.msra.mxu0 %v624
    %660 = vmatprep.subr.bf16.mxu0 %v623
    %661 = vmatpush1.bf16.msra.mxu0 %v622
    %662 = vmatprep.subr.bf16.mxu0 %v621
    %663 = vmatpush1.bf16.msra.mxu0 %v620
    %664 = vmatprep.subr.bf16.mxu0 %v619
    %665 = vmatpush1.bf16.msra.mxu0 %v618
    %666 = vmatprep.subr.bf16.mxu0 0
    %667 = vmatpush2.bf16.msra.mxu0 0
    %668 = vmatprep.subr.bf16.mxu0 0
    %669 = vmatpush2.bf16.msra.mxu0 0
    %670 = vmatprep.subr.bf16.mxu0 0
    %671 = vmatpush2.bf16.msra.mxu0 0
    %672 = vmatprep.subr.bf16.mxu0 0
    %673 = vmatpush2.bf16.msra.mxu0 0
    %674 = vmatprep.subr.bf16.mxu0 0
    %675 = vmatpush2.bf16.msra.mxu0 0
    %676 = vmatprep.subr.bf16.mxu0 0
    %677 = vmatpush2.bf16.msra.mxu0 0
    %678 = vmatprep.subr.bf16.mxu0 0
    %679 = vmatpush2.bf16.msra.mxu0 0
    %680 = vmatprep.subr.bf16.mxu0 0
    %681 = vmatpush2.bf16.msra.mxu0 0
    %682 = vmatprep.mubr.bf16.mxu0 0
    %683 = vmatmul.mubr.bf16.gmra.mxu0 %v531
    %v684 = vpop.f32.mrf.mxu0
    %v685 = vadd.f32 0.0, %v684
    %v686 = vpop.f32.mrf.mxu0
    %v687 = vadd.f32 0.0, %v686
    %v688 = vpop.f32.mrf.mxu0
    %v689 = vadd.f32 0.0, %v688
    %v690 = vpop.f32.mrf.mxu0
    %v691 = vadd.f32 0.0, %v690
    %692 = vmatprep.mubr.bf16.mxu0 0
    %693 = vmatmul.mubr.bf16.gmra.mxu0 %v534
    %v694 = vpop.f32.mrf.mxu0
    %v695 = vadd.f32 0.0, %v694
    %v696 = vpop.f32.mrf.mxu0
    %v697 = vadd.f32 0.0, %v696
    %v698 = vpop.f32.mrf.mxu0
    %v699 = vadd.f32 0.0, %v698
    %v700 = vpop.f32.mrf.mxu0
    %v701 = vadd.f32 0.0, %v700
    %702 = vmatprep.mubr.bf16.mxu0 0
    %703 = vmatmul.mubr.bf16.gmra.mxu0 %v537
    %v704 = vpop.f32.mrf.mxu0
    %v705 = vadd.f32 0.0, %v704
    %v706 = vpop.f32.mrf.mxu0
    %v707 = vadd.f32 0.0, %v706
    %v708 = vpop.f32.mrf.mxu0
    %v709 = vadd.f32 0.0, %v708
    %v710 = vpop.f32.mrf.mxu0
    %v711 = vadd.f32 0.0, %v710
    %712 = vmatprep.mubr.bf16.mxu0 0
    %713 = vmatmul.mubr.bf16.gmra.mxu0 %v540
    %v714 = vpop.f32.mrf.mxu0
    %v715 = vadd.f32 0.0, %v714
    %v716 = vpop.f32.mrf.mxu0
    %v717 = vadd.f32 0.0, %v716
    %v718 = vpop.f32.mrf.mxu0
    %v719 = vadd.f32 0.0, %v718
    %v720 = vpop.f32.mrf.mxu0
    %v721 = vadd.f32 0.0, %v720
    %722 = vmatprep.mubr.bf16.mxu0 0
    %723 = vmatmul.mubr.bf16.gmra.mxu0 %v543
    %v724 = vpop.f32.mrf.mxu0
    %v725 = vadd.f32 0.0, %v724
    %v726 = vpop.f32.mrf.mxu0
    %v727 = vadd.f32 0.0, %v726
    %v728 = vpop.f32.mrf.mxu0
    %v729 = vadd.f32 0.0, %v728
    %v730 = vpop.f32.mrf.mxu0
    %v731 = vadd.f32 0.0, %v730
    %732 = vmatprep.mubr.bf16.mxu0 0
    %733 = vmatmul.mubr.bf16.gmra.mxu0 %v546
    %v734 = vpop.f32.mrf.mxu0
    %v735 = vadd.f32 0.0, %v734
    %v736 = vpop.f32.mrf.mxu0
    %v737 = vadd.f32 0.0, %v736
    %v738 = vpop.f32.mrf.mxu0
    %v739 = vadd.f32 0.0, %v738
    %v740 = vpop.f32.mrf.mxu0
    %v741 = vadd.f32 0.0, %v740
    %742 = vmatprep.mubr.bf16.mxu0 0
    %743 = vmatmul.mubr.bf16.gmra.mxu0 %v549
    %v744 = vpop.f32.mrf.mxu0
    %v745 = vadd.f32 0.0, %v744
    %v746 = vpop.f32.mrf.mxu0
    %v747 = vadd.f32 0.0, %v746
    %v748 = vpop.f32.mrf.mxu0
    %v749 = vadd.f32 0.0, %v748
    %v750 = vpop.f32.mrf.mxu0
    %v751 = vadd.f32 0.0, %v750
    %752 = vmatprep.mubr.bf16.mxu0 0
    %753 = vmatmul.mubr.bf16.gmra.mxu0 %v552
    %v754 = vpop.f32.mrf.mxu0
    %v755 = vadd.f32 0.0, %v754
    %v756 = vpop.f32.mrf.mxu0
    %v757 = vadd.f32 0.0, %v756
    %v758 = vpop.f32.mrf.mxu0
    %v759 = vadd.f32 0.0, %v758
    %v760 = vpop.f32.mrf.mxu0
    %v761 = vadd.f32 0.0, %v760
    %762 = vdwg.mxu0
    %vm763 = vcmask 1046528
    %v764 = vsel %vm763, %v689, -inf
    %v765 = vmax.f32 %v685, %v764
    %v766 = vrot.slane %v765, 4
    %v767 = vmax.f32 %v765, %v766
    %v768 = vrot.slane %v767, 2
    %v769 = vmax.f32 %v767, %v768
    %v770 = vrot.slane %v769, 1
    %v771 = vmax.f32 %v769, %v770
    %v772 = vsel %vm763, %v699, -inf
    %v773 = vmax.f32 %v695, %v772
    %v774 = vrot.slane %v773, 4
    %v775 = vmax.f32 %v773, %v774
    %v776 = vrot.slane %v775, 2
    %v777 = vmax.f32 %v775, %v776
    %v778 = vrot.slane %v777, 1
    %v779 = vmax.f32 %v777, %v778
    %v780 = vsel %vm763, %v709, -inf
    %v781 = vmax.f32 %v705, %v780
    %v782 = vrot.slane %v781, 4
    %v783 = vmax.f32 %v781, %v782
    %v784 = vrot.slane %v783, 2
    %v785 = vmax.f32 %v783, %v784
    %v786 = vrot.slane %v785, 1
    %v787 = vmax.f32 %v785, %v786
    %v788 = vsel %vm763, %v719, -inf
    %v789 = vmax.f32 %v715, %v788
    %v790 = vrot.slane %v789, 4
    %v791 = vmax.f32 %v789, %v790
    %v792 = vrot.slane %v791, 2
    %v793 = vmax.f32 %v791, %v792
    %v794 = vrot.slane %v793, 1
    %v795 = vmax.f32 %v793, %v794
    %v796 = vsel %vm763, %v729, -inf
    %v797 = vmax.f32 %v725, %v796
    %v798 = vrot.slane %v797, 4
    %v799 = vmax.f32 %v797, %v798
    %v800 = vrot.slane %v799, 2
    %v801 = vmax.f32 %v799, %v800
    %v802 = vrot.slane %v801, 1
    %v803 = vmax.f32 %v801, %v802
    %v804 = vsel %vm763, %v739, -inf
    %v805 = vmax.f32 %v735, %v804
    %v806 = vrot.slane %v805, 4
    %v807 = vmax.f32 %v805, %v806
    %v808 = vrot.slane %v807, 2
    %v809 = vmax.f32 %v807, %v808
    %v810 = vrot.slane %v809, 1
    %v811 = vmax.f32 %v809, %v810
    %v812 = vsel %vm763, %v749, -inf
    %v813 = vmax.f32 %v745, %v812
    %v814 = vrot.slane %v813, 4
    %v815 = vmax.f32 %v813, %v814
    %v816 = vrot.slane %v815, 2
    %v817 = vmax.f32 %v815, %v816
    %v818 = vrot.slane %v817, 1
    %v819 = vmax.f32 %v817, %v818
    %v820 = vsel %vm763, %v759, -inf
    %v821 = vmax.f32 %v755, %v820
    %v822 = vrot.slane %v821, 4
    %v823 = vmax.f32 %v821, %v822
    %v824 = vrot.slane %v823, 2
    %v825 = vmax.f32 %v823, %v824
    %v826 = vrot.slane %v825, 1
    %v827 = vmax.f32 %v825, %v826
    %vm828 = vcmask 1044480
    %v829 = vsel %vm828, %v691, -inf
    %v830 = vmax.f32 %v687, %v829
    %v831 = vrot.slane %v830, 4
    %v832 = vmax.f32 %v830, %v831
    %v833 = vrot.slane %v832, 2
    %v834 = vmax.f32 %v832, %v833
    %v835 = vrot.slane %v834, 1
    %v836 = vmax.f32 %v834, %v835
    %v837 = vsel %vm828, %v701, -inf
    %v838 = vmax.f32 %v697, %v837
    %v839 = vrot.slane %v838, 4
    %v840 = vmax.f32 %v838, %v839
    %v841 = vrot.slane %v840, 2
    %v842 = vmax.f32 %v840, %v841
    %v843 = vrot.slane %v842, 1
    %v844 = vmax.f32 %v842, %v843
    %v845 = vsel %vm828, %v711, -inf
    %v846 = vmax.f32 %v707, %v845
    %v847 = vrot.slane %v846, 4
    %v848 = vmax.f32 %v846, %v847
    %v849 = vrot.slane %v848, 2
    %v850 = vmax.f32 %v848, %v849
    %v851 = vrot.slane %v850, 1
    %v852 = vmax.f32 %v850, %v851
    %v853 = vsel %vm828, %v721, -inf
    %v854 = vmax.f32 %v717, %v853
    %v855 = vrot.slane %v854, 4
    %v856 = vmax.f32 %v854, %v855
    %v857 = vrot.slane %v856, 2
    %v858 = vmax.f32 %v856, %v857
    %v859 = vrot.slane %v858, 1
    %v860 = vmax.f32 %v858, %v859
    %v861 = vsel %vm828, %v731, -inf
    %v862 = vmax.f32 %v727, %v861
    %v863 = vrot.slane %v862, 4
    %v864 = vmax.f32 %v862, %v863
    %v865 = vrot.slane %v864, 2
    %v866 = vmax.f32 %v864, %v865
    %v867 = vrot.slane %v866, 1
    %v868 = vmax.f32 %v866, %v867
    %v869 = vsel %vm828, %v741, -inf
    %v870 = vmax.f32 %v737, %v869
    %v871 = vrot.slane %v870, 4
    %v872 = vmax.f32 %v870, %v871
    %v873 = vrot.slane %v872, 2
    %v874 = vmax.f32 %v872, %v873
    %v875 = vrot.slane %v874, 1
    %v876 = vmax.f32 %v874, %v875
    %v877 = vsel %vm828, %v751, -inf
    %v878 = vmax.f32 %v747, %v877
    %v879 = vrot.slane %v878, 4
    %v880 = vmax.f32 %v878, %v879
    %v881 = vrot.slane %v880, 2
    %v882 = vmax.f32 %v880, %v881
    %v883 = vrot.slane %v882, 1
    %v884 = vmax.f32 %v882, %v883
    %v885 = vsel %vm828, %v761, -inf
    %v886 = vmax.f32 %v757, %v885
    %v887 = vrot.slane %v886, 4
    %v888 = vmax.f32 %v886, %v887
    %v889 = vrot.slane %v888, 2
    %v890 = vmax.f32 %v888, %v889
    %v891 = vrot.slane %v890, 1
    %v892 = vmax.f32 %v890, %v891
    %vm901 = vcmask 1041409
    %v902 = vsel %vm901, %v779, %v771
    %vm903 = vcmask 1042434
    %v904 = vsel %vm903, %v787, %v902
    %vm905 = vcmask 1043459
    %v906 = vsel %vm905, %v795, %v904
    %vm907 = vcmask 1044484
    %v908 = vsel %vm907, %v803, %v906
    %vm909 = vcmask 1045509
    %v910 = vsel %vm909, %v811, %v908
    %vm911 = vcmask 1046534
    %v912 = vsel %vm911, %v819, %v910
    %vm913 = vcmask 1047559
    %v914 = vsel %vm913, %v827, %v912
    %v924 = vsel %vm901, %v844, %v836
    %v925 = vsel %vm903, %v852, %v924
    %v926 = vsel %vm905, %v860, %v925
    %v927 = vsel %vm907, %v868, %v926
    %v928 = vsel %vm909, %v876, %v927
    %v929 = vsel %vm911, %v884, %v928
    %v930 = vsel %vm913, %v892, %v929
    %v932 = vld [vmem:[%s2] sm:$0x3]
    %v934 = vlaneseq
    %v935 = vshrl.u32 %v934, 7
    %v936 = vsub.s32 0, %v935
    %v937 = vrot.slane %v932, %v936
    %v938 = vlaneseq
    %v939 = vshrl.u32 %v938, 7
    %v940 = vsub.s32 1, %v939
    %v941 = vrot.slane %v932, %v940
    %v944 = vadd.f32 %v914, %v937
    %v945 = vadd.f32 %v930, %v941
    %v946 = vmax.f32 %v944, 0.0
    %v947 = vmax.f32 %v945, 0.0
    %v948 = vpack.c.bf16 %v946, %v946
    %v949 = vpack.c.bf16 %v947, %v947
    %v950 = vld [vmem:[#allocation2] sm:$0xf]
    %v951 = vld [vmem:[#allocation2 + $0x4] sm:$0xf]
    %v952 = vld [vmem:[#allocation2 + $0x8] sm:$0xf]
    %v953 = vld [vmem:[#allocation2 + $0xc] sm:$0xf]
    %v954 = vld [vmem:[#allocation2 + $0x10] sm:$0xf]
    %v955 = vld [vmem:[#allocation2 + $0x14] sm:$0xf]
    %v956 = vld [vmem:[#allocation2 + $0x18] sm:$0xf]
    %v957 = vld [vmem:[#allocation2 + $0x1c] sm:$0xf]
    %v958 = vld [vmem:[#allocation2 + $0x20] sm:$0xf]
    %v959 = vld [vmem:[#allocation2 + $0x24] sm:$0xf]
    %v960 = vld [vmem:[#allocation2 + $0x28] sm:$0xf]
    %v961 = vld [vmem:[#allocation2 + $0x2c] sm:$0xf]
    %v962 = vld [vmem:[#allocation2 + $0x30] sm:$0xf]
    %v963 = vld [vmem:[#allocation2 + $0x34] sm:$0xf]
    %v964 = vld [vmem:[#allocation2 + $0x38] sm:$0xf]
    %v965 = vld [vmem:[#allocation2 + $0x3c] sm:$0xf]
    %v966 = vld [vmem:[#allocation2 + $0x40] sm:$0xf]
    %v967 = vld [vmem:[#allocation2 + $0x44] sm:$0xf]
    %v968 = vld [vmem:[#allocation2 + $0x48] sm:$0xf]
    %v969 = vld [vmem:[#allocation2 + $0x4c] sm:$0xf]
    %v970 = vld [vmem:[#allocation2 + $0x50] sm:$0xf]
    %v971 = vld [vmem:[#allocation2 + $0x54] sm:$0xf]
    %v972 = vld [vmem:[#allocation2 + $0x58] sm:$0xf]
    %v973 = vld [vmem:[#allocation2 + $0x5c] sm:$0xf]
    %v974 = vld [vmem:[#allocation2 + $0x60] sm:$0xf]
    %v975 = vld [vmem:[#allocation2 + $0x64] sm:$0xf]
    %v976 = vld [vmem:[#allocation2 + $0x68] sm:$0xf]
    %v977 = vld [vmem:[#allocation2 + $0x6c] sm:$0xf]
    %v978 = vld [vmem:[#allocation2 + $0x70] sm:$0xf]
    %v979 = vld [vmem:[#allocation2 + $0x74] sm:$0xf]
    %v980 = vld [vmem:[#allocation2 + $0x78] sm:$0xf]
    %v981 = vld [vmem:[#allocation2 + $0x7c] sm:$0xf]
    %v982 = vld [vmem:[%s4] sm:$0x1]
    %v984 = vlaneseq
    %v985 = vshrl.u32 %v984, 7
    %v986 = vsub.s32 0, %v985
    %v987 = vrot.slane %v982, %v986
    %v1021 = vunpack.c.l.b16 %v950
    %v1022 = vunpack.c.l.b16 %v951
    %v1023 = vunpack.c.l.b16 %v952
    %v1024 = vunpack.c.l.b16 %v953
    %v1025 = vunpack.c.l.b16 %v954
    %v1026 = vunpack.c.l.b16 %v955
    %v1027 = vunpack.c.l.b16 %v956
    %v1028 = vunpack.c.l.b16 %v957
    %v1029 = vunpack.c.l.b16 %v958
    %v1030 = vunpack.c.l.b16 %v959
    %v1031 = vunpack.c.l.b16 %v960
    %v1032 = vunpack.c.l.b16 %v961
    %v1033 = vunpack.c.l.b16 %v962
    %v1034 = vunpack.c.l.b16 %v963
    %v1035 = vunpack.c.l.b16 %v964
    %v1036 = vunpack.c.l.b16 %v965
    %v1037 = vunpack.c.l.b16 %v966
    %v1038 = vunpack.c.l.b16 %v967
    %v1039 = vunpack.c.l.b16 %v968
    %v1040 = vunpack.c.l.b16 %v969
    %v1041 = vunpack.c.l.b16 %v970
    %v1042 = vunpack.c.l.b16 %v971
    %v1043 = vunpack.c.l.b16 %v972
    %v1044 = vunpack.c.l.b16 %v973
    %v1045 = vunpack.c.l.b16 %v974
    %v1046 = vunpack.c.l.b16 %v975
    %v1047 = vunpack.c.l.b16 %v976
    %v1048 = vunpack.c.l.b16 %v977
    %v1049 = vunpack.c.l.b16 %v978
    %v1050 = vunpack.c.l.b16 %v979
    %v1051 = vunpack.c.l.b16 %v980
    %v1052 = vunpack.c.l.b16 %v981
    %v1053 = vpack.c.b16 %v1022, %v1021
    %v1054 = vpack.c.b16 %v1024, %v1023
    %v1055 = vpack.c.b16 %v1026, %v1025
    %v1056 = vpack.c.b16 %v1028, %v1027
    %v1057 = vpack.c.b16 %v1030, %v1029
    %v1058 = vpack.c.b16 %v1032, %v1031
    %v1059 = vpack.c.b16 %v1034, %v1033
    %v1060 = vpack.c.b16 %v1036, %v1035
    %v1061 = vpack.c.b16 %v1038, %v1037
    %v1062 = vpack.c.b16 %v1040, %v1039
    %v1063 = vpack.c.b16 %v1042, %v1041
    %v1064 = vpack.c.b16 %v1044, %v1043
    %v1065 = vpack.c.b16 %v1046, %v1045
    %v1066 = vpack.c.b16 %v1048, %v1047
    %v1067 = vpack.c.b16 %v1050, %v1049
    %v1068 = vpack.c.b16 %v1052, %v1051
    %1085 = vmatprep.subr.bf16.mxu0 0
    %1086 = vmatpush1.bf16.msra.mxu0 %v1060
    %1087 = vmatprep.subr.bf16.mxu0 0
    %1088 = vmatpush1.bf16.msra.mxu0 %v1059
    %1089 = vmatprep.subr.bf16.mxu0 0
    %1090 = vmatpush1.bf16.msra.mxu0 %v1058
    %1091 = vmatprep.subr.bf16.mxu0 0
    %1092 = vmatpush1.bf16.msra.mxu0 %v1057
    %1093 = vmatprep.subr.bf16.mxu0 0
    %1094 = vmatpush1.bf16.msra.mxu0 %v1056
    %1095 = vmatprep.subr.bf16.mxu0 0
    %1096 = vmatpush1.bf16.msra.mxu0 %v1055
    %1097 = vmatprep.subr.bf16.mxu0 0
    %1098 = vmatpush1.bf16.msra.mxu0 %v1054
    %1099 = vmatprep.subr.bf16.mxu0 0
    %1100 = vmatpush1.bf16.msra.mxu0 %v1053
    %1101 = vmatprep.subr.bf16.mxu0 0
    %1102 = vmatpush2.bf16.msra.mxu0 %v1068
    %1103 = vmatprep.subr.bf16.mxu0 0
    %1104 = vmatpush2.bf16.msra.mxu0 %v1067
    %1105 = vmatprep.subr.bf16.mxu0 0
    %1106 = vmatpush2.bf16.msra.mxu0 %v1066
    %1107 = vmatprep.subr.bf16.mxu0 0
    %1108 = vmatpush2.bf16.msra.mxu0 %v1065
    %1109 = vmatprep.subr.bf16.mxu0 0
    %1110 = vmatpush2.bf16.msra.mxu0 %v1064
    %1111 = vmatprep.subr.bf16.mxu0 0
    %1112 = vmatpush2.bf16.msra.mxu0 %v1063
    %1113 = vmatprep.subr.bf16.mxu0 0
    %1114 = vmatpush2.bf16.msra.mxu0 %v1062
    %1115 = vmatprep.subr.bf16.mxu0 0
    %1116 = vmatpush2.bf16.msra.mxu0 %v1061
    %1117 = vmatprep.mubr.bf16.mxu0 %v949
    %1118 = vmatmul.mubr.bf16.gmra.mxu0 %v948
    %v1119 = vpop.f32.mrf.mxu0
    %v1120 = vadd.f32 %v987, %v1119
    %v1121 = vpop.f32.mrf.mxu0
    %v1122 = vpop.f32.mrf.mxu0
    %v1123 = vpop.f32.mrf.mxu0
    %1124 = vdwg.mxu0
    %1125 = vst [vmem:[#allocation5] sm:$0xff] %v1120
    // Predicated region
    $region26: #{tpu_custom_call.1} parent=1 // pred_check
      _
    $region27: #{tpu_custom_call.1} parent=1 // pred_check_branch
      %1127 = sbr.rel (0) target = $region29
    $region28: #{tpu_custom_call.1} parent=1 // pred_region
      %s1129 = ssub.s32 128, 128
      %1130 = vsyncadd [#allocation4], %s1129
      %s1132 = sshll.u32 [#allocation5], 4
      %s1133 = int_to_ptr.vmem [resolvable:$true] %s1132
      %1135 = dma.vmem_to_hbm [thread:$0]  %s1133, 128, %s5, [#allocation4]
    $region29: #{tpu_custom_call.1} parent=1 // pred_fallthru
      _
    // Predicated region
    $region30: #{tpu_custom_call.1} parent=1 // pred_check
      _
    $region31: #{tpu_custom_call.1} parent=1 // pred_check_branch
      %1137 = sbr.rel (0) target = $region33
    $region32: #{tpu_custom_call.1} parent=1 // pred_region
      %1138 = dma.done [#allocation4], 128
    $region33: #{tpu_custom_call.1} parent=1 // pred_fallthru
      _
    %1139 = vsyncpa [#allocation3], 1
    %1140 = vsyncpa [#allocation4], 1

</llo_original>
